<compile_context>
chip_gen: v5e
topology: v5e:2x2
jax: 0.10.0
libtpu: 0.0.40
codegen_flags: <defaults>
</compile_context>

<pallas_src>
import functools

import jax
import jax.numpy as jnp
from jax.experimental import pallas as pl
from jax.experimental.pallas import tpu as pltpu


def _round_up(x, m):
    return ((x + m - 1) // m) * m


_LN_EPS = 1e-6
_VMEM_LIMIT = 32 * 1024 * 1024


def _layer_norm_f32(y, gamma, beta, eps=_LN_EPS):
    # Matches the module's LayerNorm: (x - mean) / (std + eps), std unbiased=False.
    mean = jnp.mean(y, axis=-1, keepdims=True)
    std = jnp.sqrt(jnp.mean((y - mean) ** 2, axis=-1, keepdims=True))
    return (y - mean) / (std + eps) * gamma + beta


# ---------------------------------------------------------------------------
# Pallas kernel 1: fused gcn (propagation + concat-free mlp) + residual + LayerNorm
# ---------------------------------------------------------------------------
def _gcn_res_ln_kernel(x_ref, a_ref, w_ref, b_ref, g_ref, be_ref, o_ref, *, n_prop, tb):
    # x_ref : (TB, V*L, C)        f32   current batch tile (also the residual)
    # a_ref : (n_prop*V*L, V*L)   bf16  stacked propagation operator (resident)
    # w_ref : (K, C, c_out)       bf16  mlp weight split along the K*C axis (resident)
    # b_ref : (1, c_out)          f32   mlp bias;  g_ref/be_ref: LayerNorm gamma/beta
    # o_ref : (TB, V*L, c_out)    f32
    a = a_ref[...]
    bias = b_ref[...]
    gamma = g_ref[...]
    beta = be_ref[...]
    vl = a.shape[-1]
    for i in range(tb):  # static unroll over the batch tile
        x32 = x_ref[i]                                                   # (VL, C) f32
        xb = x32.astype(jnp.bfloat16)
        # all S*order propagated hops in one MXU matmul
        props = jnp.dot(a, xb, preferred_element_type=jnp.float32)       # (n_prop*VL, C)
        # mlp applied piece-wise (W split along K*C) -- never materialise concat(h)
        acc = jnp.dot(xb, w_ref[0], preferred_element_type=jnp.float32)  # (VL, c_out)
        for j in range(n_prop):
            pj = props[j * vl:(j + 1) * vl, :].astype(jnp.bfloat16)
            acc = acc + jnp.dot(pj, w_ref[j + 1],
                                preferred_element_type=jnp.float32)
        y = acc + bias + x32                      # SkipConnection residual (f32)
        o_ref[i] = _layer_norm_f32(y, gamma, beta).astype(o_ref.dtype)
    # TODO(synk): F.dropout after the mlp is identity in eval mode; a training version
    # would use pltpu.prng_seed / pltpu.prng_random_bits for the mask.


def build_prop_operator(supports, seq_len, order=2):
    """Stacked operator: row block = kron((A_s^T)^k, I_L), torch hop order
    [s0k1, s0k2, s1k1, s1k2, ...], acting on x flattened as (V*L, C)."""
    eye_l = jnp.eye(seq_len, dtype=jnp.float32)
    blocks = []
    for a in supports:
        at = jnp.transpose(a).astype(jnp.float32)
        p = at
        for k in range(1, order + 1):
            if k > 1:
                p = p @ at                       # (A^T)^k
            blocks.append(jnp.kron(p, eye_l))    # (V*L, V*L)
    return jnp.concatenate(blocks, axis=0).astype(jnp.bfloat16)


def gcn_res_ln_pallas(x, abig, w, b, gamma, beta, *, batch_tile=1,
                      out_dtype=jnp.float32):
    """Fused LN(x + gcn(x)).  x: (N, V, L, C); abig: (n_prop*V*L, V*L);
    w: (c_out, K*C) (torch nn.Linear layout); b/gamma/beta: (c_out,)."""
    N, V, L, C = x.shape
    VL = V * L
    c_out = w.shape[0]
    K = w.shape[1] // C
    n_prop = K - 1
    assert c_out == C, "gcn skip connection requires c_out == c_in"
    assert abig.shape == (n_prop * VL, VL)

    wk = jnp.transpose(w).reshape(K, C, c_out).astype(jnp.bfloat16)  # chunk k <-> piece k
    b2 = b.reshape(1, c_out).astype(jnp.float32)
    g2 = gamma.reshape(1, c_out).astype(jnp.float32)
    be2 = beta.reshape(1, c_out).astype(jnp.float32)

    x3 = x.reshape(N, VL, C).astype(jnp.float32)
    TB = max(1, min(batch_tile, N))
    Np = _round_up(N, TB)
    if Np != N:
        x3 = jnp.pad(x3, ((0, Np - N), (0, 0), (0, 0)))

    out = pl.pallas_call(
        functools.partial(_gcn_res_ln_kernel, n_prop=n_prop, tb=TB),
        grid=(Np // TB,),
        in_specs=[
            pl.BlockSpec((TB, VL, C), lambda i: (i, 0, 0)),
            pl.BlockSpec((n_prop * VL, VL), lambda i: (0, 0)),
            pl.BlockSpec((K, C, c_out), lambda i: (0, 0, 0)),
            pl.BlockSpec((1, c_out), lambda i: (0, 0)),
            pl.BlockSpec((1, c_out), lambda i: (0, 0)),
            pl.BlockSpec((1, c_out), lambda i: (0, 0)),
        ],
        out_specs=pl.BlockSpec((TB, VL, c_out), lambda i: (i, 0, 0)),
        out_shape=jax.ShapeDtypeStruct((Np, VL, c_out), out_dtype),
        compiler_params=pltpu.CompilerParams(
            dimension_semantics=("parallel",),
            vmem_limit_bytes=_VMEM_LIMIT),
    )(x3, abig, wk, b2, g2, be2)

    return out[:N].reshape(N, V, L, c_out)


def gcn_reference(x, supports, w, b, *, order=2):
    """Pure-f32 re-implementation of the PyTorch gcn.forward (dropout in eval mode)."""
    out = [x]
    for a in supports:
        x1 = jnp.einsum('nvlc,vw->nwlc', x, a)
        out.append(x1)
        for _ in range(2, order + 1):
            x2 = jnp.einsum('nvlc,vw->nwlc', x1, a)
            out.append(x2)
            x1 = x2
    h = jnp.concatenate(out, axis=-1)
    return jnp.einsum('nvlc,oc->nvlo', h, w) + b


# ---------------------------------------------------------------------------
# Pallas kernel 2: row-tiled Linear (+ fused pre/post activation)
# ---------------------------------------------------------------------------
def _linear_kernel(x_ref, w_ref, b_ref, o_ref, *, act, pre_act):
    x = x_ref[...]
    if pre_act == "relu":
        x = jnp.maximum(x, 0)
    y = jnp.dot(x, w_ref[...], preferred_element_type=jnp.float32) + b_ref[...]
    if act == "gelu":
        y = jax.nn.gelu(y)
    elif act == "relu":
        y = jnp.maximum(y, 0.0)
    o_ref[...] = y.astype(o_ref.dtype)


def linear_pallas(x2, w, b, *, act="none", pre_act="none", row_tile=512,
                  out_dtype=jnp.float32):
    """x2: (R, Cin); w: (Cout, Cin) (torch nn.Linear layout); b: (Cout,)."""
    R, Cin = x2.shape
    Cout = w.shape[0]
    TR = min(row_tile, _round_up(R, 8))
    Rp = _round_up(R, TR)
    xp = x2.astype(jnp.bfloat16)
    if Rp != R:
        xp = jnp.pad(xp, ((0, Rp - R), (0, 0)))
    wt = jnp.transpose(w).astype(jnp.bfloat16)
    b2 = b.reshape(1, Cout).astype(jnp.float32)
    out = pl.pallas_call(
        functools.partial(_linear_kernel, act=act, pre_act=pre_act),
        grid=(Rp // TR,),
        in_specs=[
            pl.BlockSpec((TR, Cin), lambda i: (i, 0)),
            pl.BlockSpec((Cin, Cout), lambda i: (0, 0)),
            pl.BlockSpec((1, Cout), lambda i: (0, 0)),
        ],
        out_specs=pl.BlockSpec((TR, Cout), lambda i: (i, 0)),
        out_shape=jax.ShapeDtypeStruct((Rp, Cout), out_dtype),
        compiler_params=pltpu.CompilerParams(
            dimension_semantics=("parallel",),
            vmem_limit_bytes=_VMEM_LIMIT),
    )(xp, wt, b2)
    return out[:R]


def dense(x, w, b, *, act="none", pre_act="none", use_pallas=True):
    """nn.Linear over the last axis of an arbitrarily shaped x."""
    shape = x.shape
    if use_pallas:
        y = linear_pallas(x.reshape(-1, shape[-1]), w, b, act=act, pre_act=pre_act)
        return y.reshape(shape[:-1] + (w.shape[0],))
    xx = x
    if pre_act == "relu":
        xx = jnp.maximum(xx, 0.0)
    y = jnp.einsum('...i,oi->...o', xx.astype(jnp.bfloat16), w.astype(jnp.bfloat16),
                   preferred_element_type=jnp.float32) + b
    if act == "gelu":
        y = jax.nn.gelu(y)
    elif act == "relu":
        y = jnp.maximum(y, 0.0)
    return y


# ---------------------------------------------------------------------------
# Pallas kernel 3: attention output projection + residual + LayerNorm (fused)
# ---------------------------------------------------------------------------
def _proj_res_ln_kernel(x_ref, r_ref, w_ref, b_ref, g_ref, be_ref, o_ref):
    y = jnp.dot(x_ref[...].astype(jnp.bfloat16), w_ref[...],
                preferred_element_type=jnp.float32)
    y = y + b_ref[...] + r_ref[...]
    o_ref[...] = _layer_norm_f32(y, g_ref[...], be_ref[...]).astype(o_ref.dtype)


def proj_res_ln_pallas(x2, resid2, w, b, gamma, beta, *, row_tile=512,
                       out_dtype=jnp.float32):
    R, Cin = x2.shape
    Cout = w.shape[0]
    TR = min(row_tile, _round_up(R, 8))
    Rp = _round_up(R, TR)
    xp = x2.astype(jnp.float32)
    rp = resid2.astype(jnp.float32)
    if Rp != R:
        xp = jnp.pad(xp, ((0, Rp - R), (0, 0)))
        rp = jnp.pad(rp, ((0, Rp - R), (0, 0)))
    wt = jnp.transpose(w).astype(jnp.bfloat16)
    b2 = b.reshape(1, Cout).astype(jnp.float32)
    g2 = gamma.reshape(1, Cout).astype(jnp.float32)
    be2 = beta.reshape(1, Cout).astype(jnp.float32)
    out = pl.pallas_call(
        _proj_res_ln_kernel,
        grid=(Rp // TR,),
        in_specs=[
            pl.BlockSpec((TR, Cin), lambda i: (i, 0)),
            pl.BlockSpec((TR, Cout), lambda i: (i, 0)),
            pl.BlockSpec((Cin, Cout), lambda i: (0, 0)),
            pl.BlockSpec((1, Cout), lambda i: (0, 0)),
            pl.BlockSpec((1, Cout), lambda i: (0, 0)),
            pl.BlockSpec((1, Cout), lambda i: (0, 0)),
        ],
        out_specs=pl.BlockSpec((TR, Cout), lambda i: (i, 0)),
        out_shape=jax.ShapeDtypeStruct((Rp, Cout), out_dtype),
        compiler_params=pltpu.CompilerParams(
            dimension_semantics=("parallel",),
            vmem_limit_bytes=_VMEM_LIMIT),
    )(xp, rp, wt, b2, g2, be2)
    return out[:R]


# ---------------------------------------------------------------------------
# Pallas kernel 4: feed-forward (2 matmuls + GELU) + residual + LayerNorm (fused)
# ---------------------------------------------------------------------------
def _ffn_res_ln_kernel(x_ref, w1_ref, b1_ref, w2_ref, b2_ref, g_ref, be_ref, o_ref):
    x32 = x_ref[...]
    xb = x32.astype(jnp.bfloat16)
    h = jnp.dot(xb, w1_ref[...], preferred_element_type=jnp.float32) + b1_ref[...]
    h = jax.nn.gelu(h)  # TODO(synk): torch nn.GELU() is exact (erf); tanh approx used here.
    y = jnp.dot(h.astype(jnp.bfloat16), w2_ref[...],
                preferred_element_type=jnp.float32) + b2_ref[...] + x32
    o_ref[...] = _layer_norm_f32(y, g_ref[...], be_ref[...]).astype(o_ref.dtype)


def ffn_res_ln_pallas(x2, w1, b1, w2, b2, gamma, beta, *, row_tile=512,
                      out_dtype=jnp.float32):
    R, H = x2.shape
    Hff = w1.shape[0]
    TR = min(row_tile, _round_up(R, 8))
    Rp = _round_up(R, TR)
    xp = x2.astype(jnp.float32)
    if Rp != R:
        xp = jnp.pad(xp, ((0, Rp - R), (0, 0)))
    w1t = jnp.transpose(w1).astype(jnp.bfloat16)
    w2t = jnp.transpose(w2).astype(jnp.bfloat16)
    b1r = b1.reshape(1, Hff).astype(jnp.float32)
    b2r = b2.reshape(1, H).astype(jnp.float32)
    g2 = gamma.reshape(1, H).astype(jnp.float32)
    be2 = beta.reshape(1, H).astype(jnp.float32)
    out = pl.pallas_call(
        _ffn_res_ln_kernel,
        grid=(Rp // TR,),
        in_specs=[
            pl.BlockSpec((TR, H), lambda i: (i, 0)),
            pl.BlockSpec((H, Hff), lambda i: (0, 0)),
            pl.BlockSpec((1, Hff), lambda i: (0, 0)),
            pl.BlockSpec((Hff, H), lambda i: (0, 0)),
            pl.BlockSpec((1, H), lambda i: (0, 0)),
            pl.BlockSpec((1, H), lambda i: (0, 0)),
            pl.BlockSpec((1, H), lambda i: (0, 0)),
        ],
        out_specs=pl.BlockSpec((TR, H), lambda i: (i, 0)),
        out_shape=jax.ShapeDtypeStruct((Rp, H), out_dtype),
        compiler_params=pltpu.CompilerParams(
            dimension_semantics=("parallel",),
            vmem_limit_bytes=_VMEM_LIMIT),
    )(xp, w1t, b1r, w2t, b2r, g2, be2)
    return out[:R]


# ---------------------------------------------------------------------------
# Model blocks (SkipConnection wrappers)
# ---------------------------------------------------------------------------
def attention_block(x, norm_p, p, *, kv=None, num_heads=4, use_pallas=True):
    """LN(x + QKVAttention(x, kv)) — SkipConnection(t_attn / ed_attn, norm)."""
    if kv is None:
        # fused q/k/v projection: one matmul with concatenated weights
        wqkv = jnp.concatenate([p['wq'], p['wk'], p['wv']], axis=0)
        bqkv = jnp.concatenate([p['bq'], p['bk'], p['bv']], axis=0)
        qkv = dense(x, wqkv, bqkv, use_pallas=use_pallas)
        H = p['wq'].shape[0]
        q, k, v = qkv[..., :H], qkv[..., H:2 * H], qkv[..., 2 * H:]
    else:
        q = dense(x, p['wq'], p['bq'], use_pallas=use_pallas)
        wkv = jnp.concatenate([p['wk'], p['wv']], axis=0)
        bkv = jnp.concatenate([p['bk'], p['bv']], axis=0)
        kvp = dense(kv, wkv, bkv, use_pallas=use_pallas)
        H = p['wk'].shape[0]
        k, v = kvp[..., :H], kvp[..., H:]

    N, V, L, H = q.shape
    Lk = k.shape[2]
    dh = H // num_heads
    # torch's chunk(dim=-1) + cat(dim=0) == independent per-head attention.
    qh = q.reshape(N, V, L, num_heads, dh)
    kh = k.reshape(N, V, Lk, num_heads, dh)
    vh = v.reshape(N, V, Lk, num_heads, dh)
    scores = jnp.einsum('nvlhd,nvmhd->nvhlm', qh, kh) * (1.0 / (dh ** 0.5))
    attn = jax.nn.softmax(scores, axis=-1)
    oh = jnp.einsum('nvhlm,nvmhd->nvlhd', attn, vh)
    o = oh.reshape(N, V, L, H)        # heads back along channels (torch cat order)
    # TODO(synk): the tiny LxL softmax core is left to XLA; dropout = identity (eval).

    if use_pallas:
        y = proj_res_ln_pallas(o.reshape(-1, H), x.reshape(-1, H),
                               p['wp'], p['bp'], norm_p['gamma'], norm_p['beta'])
        return y.reshape(x.shape)
    proj = dense(o, p['wp'], p['bp'], use_pallas=False)
    return _layer_norm_f32(x + proj, norm_p['gamma'], norm_p['beta'])


def ff_block(x, norm_p, p, *, use_pallas=True):
    """LN(x + FFN(x)) — SkipConnection(PositionwiseFeedForward, norm)."""
    if use_pallas:
        H = x.shape[-1]
        y = ffn_res_ln_pallas(x.reshape(-1, H), p['w1'], p['b1'], p['w2'], p['b2'],
                              norm_p['gamma'], norm_p['beta'])
        return y.reshape(x.shape)
    h = dense(x, p['w1'], p['b1'], act="gelu", use_pallas=False)
    y = dense(h, p['w2'], p['b2'], use_pallas=False)
    return _layer_norm_f32(x + y, norm_p['gamma'], norm_p['beta'])


def gcn_block(x, supports, abig, norm_p, p, *, order=2, use_pallas=True):
    """LN(x + gcn(x, supports)) — SkipConnection(gcn, norm)."""
    if use_pallas:
        return gcn_res_ln_pallas(x, abig, p['w'], p['b'],
                                 norm_p['gamma'], norm_p['beta'])
    g = gcn_reference(x, supports, p['w'], p['b'], order=order)
    return _layer_norm_f32(x + g, norm_p['gamma'], norm_p['beta'])


# ---------------------------------------------------------------------------
# STModel forward
# ---------------------------------------------------------------------------
def stmodel_forward(x, prev_hidden, supports, params, *, spatial=False, out_dim=1,
                    num_heads=4, order=2, use_pallas=True):
    """Mirrors STModel.forward.  x: (N, in_dim, V, L)."""
    x = jnp.transpose(x, (0, 2, 3, 1))                                  # (N, V, L, in_dim)
    x = dense(x, params['start_w'], params['start_b'], use_pallas=use_pallas)
    x_start = x
    L = x.shape[2]
    # the stacked propagation operator is shared by every layer: build it once
    abig = build_prop_operator(supports, L, order=order) if use_pallas else None
    hiddens = []
    for lp in params['layers']:
        if not spatial:
            x1 = attention_block(x, lp['t_norm'], lp['t_attn'], num_heads=num_heads,
                                 use_pallas=use_pallas)
            x_attn = gcn_block(x1, supports, abig, lp['s_norm'], lp['gcn'],
                               order=order, use_pallas=use_pallas)
        else:
            x1 = gcn_block(x, supports, abig, lp['s_norm'], lp['gcn'],
                           order=order, use_pallas=use_pallas)
            x_attn = attention_block(x1, lp['t_norm'], lp['t_attn'],
                                     num_heads=num_heads, use_pallas=use_pallas)
        if prev_hidden is not None:
            x_attn = attention_block(x_attn, lp['ed_norm'], lp['ed_attn'],
                                     kv=prev_hidden, num_heads=num_heads,
                                     use_pallas=use_pallas)
        x = ff_block(x_attn, lp['ff_norm'], lp['ff'], use_pallas=use_pallas)
        hiddens.append(x)
    out = dense(x, params['proj_w'], params['proj_b'], pre_act="relu",
                use_pallas=use_pallas)                                   # proj(relu(x))
    res = out[..., :-out_dim]
    y = out[..., -out_dim:]
    return x_start - res, y, hiddens


# ---------------------------------------------------------------------------
# Parameter construction
# ---------------------------------------------------------------------------
def _linear_params(key, fan_in, fan_out):
    kw, kb = jax.random.split(key)
    w = jax.random.normal(kw, (fan_out, fan_in), jnp.float32) / jnp.sqrt(float(fan_in))
    b = jax.random.normal(kb, (fan_out,), jnp.float32) * 0.01
    return w, b


def init_stmodel_params(key, *, hidden, in_dim, out_dim, layers, supports_len, order=2):
    keys = jax.random.split(key, 2 + layers)
    params = {}
    params['start_w'], params['start_b'] = _linear_params(keys[0], in_dim, hidden)
    params['proj_w'], params['proj_b'] = _linear_params(keys[1], hidden, hidden + out_dim)
    K = order * supports_len + 1

    def norm_params():
        return dict(gamma=jnp.ones((hidden,), jnp.float32),
                    beta=jnp.zeros((hidden,), jnp.float32))

    def attn_params(ks):
        wq, bq = _linear_params(ks[0], hidden, hidden)
        wk, bk = _linear_params(ks[1], hidden, hidden)
        wv, bv = _linear_params(ks[2], hidden, hidden)
        wp, bp = _linear_params(ks[3], hidden, hidden)
        return dict(wq=wq, bq=bq, wk=wk, bk=bk, wv=wv, bv=bv, wp=wp, bp=bp)

    layer_params = []
    for li in range(layers):
        lk = jax.random.split(keys[2 + li], 11)
        gw, gb = _linear_params(lk[8], K * hidden, hidden)
        w1, b1 = _linear_params(lk[9], hidden, 4 * hidden)
        w2, b2 = _linear_params(lk[10], 4 * hidden, hidden)
        layer_params.append(dict(
            t_attn=attn_params(lk[0:4]), t_norm=norm_params(),
            gcn=dict(w=gw, b=gb), s_norm=norm_params(),
            ed_attn=attn_params(lk[4:8]), ed_norm=norm_params(),
            ff=dict(w1=w1, b1=b1, w2=w2, b2=b2), ff_norm=norm_params()))
    params['layers'] = layer_params
    return params


# ---------------------------------------------------------------------------
if __name__ == "__main__":
    key = jax.random.PRNGKey(0)
    N, V, L = 2, 16, 8                 # batch, nodes (spatial), seq_len
    hidden, in_dim, out_dim = 32, 2, 1
    layers, supports_len, order = 2, 2, 2
    num_heads = 4

    (k_in, k_a1, k_a2, k_prev, k_par, k_gx, k_gw, k_gb) = jax.random.split(key, 8)
    x_in = jax.random.normal(k_in, (N, in_dim, V, L), jnp.float32)
    a1 = jax.nn.softmax(jax.random.normal(k_a1, (V, V), jnp.float32), axis=-1)
    a2 = jax.nn.softmax(jax.random.normal(k_a2, (V, V), jnp.float32), axis=-1)
    supports = [a1, a2]
    prev_hidden = jax.random.normal(k_prev, (N, V, L, hidden), jnp.float32)
    params = init_stmodel_params(k_par, hidden=hidden, in_dim=in_dim, out_dim=out_dim,
                                 layers=layers, supports_len=supports_len, order=order)

    # ---- check 1: fused gcn(+residual+LN) kernel vs pure-f32 einsum reference ----
    xg = jax.random.normal(k_gx, (N, V, L, hidden), jnp.float32)
    c_in_mlp = (order * supports_len + 1) * hidden
    gw = jax.random.normal(k_gw, (hidden, c_in_mlp), jnp.float32) / jnp.sqrt(float(c_in_mlp))
    gb = jax.random.normal(k_gb, (hidden,), jnp.float32) * 0.01
    g_gamma = jnp.ones((hidden,), jnp.float32)
    g_beta = jnp.zeros((hidden,), jnp.float32)
    abig = build_prop_operator(supports, L, order=order)
    g_out = jax.block_until_ready(
        gcn_res_ln_pallas(xg, abig, gw, gb, g_gamma, g_beta))
    g_ref = _layer_norm_f32(xg + gcn_reference(xg, supports, gw, gb, order=order),
                            g_gamma, g_beta)
    assert g_out.shape == g_ref.shape, (g_out.shape, g_ref.shape)
    g_err = float(jnp.max(jnp.abs(g_out - g_ref)))
    assert g_err < 5e-2, f"gcn kernel mismatch: {g_err}"

    # ---- check 2: full STModel forward (Pallas kernels vs plain-JAX path) ----
    fwd_pallas = jax.jit(functools.partial(
        stmodel_forward, spatial=False, out_dim=out_dim, num_heads=num_heads,
        order=order, use_pallas=True))
    fwd_ref = functools.partial(
        stmodel_forward, spatial=False, out_dim=out_dim, num_heads=num_heads,
        order=order, use_pallas=False)

    res_p, out_p, hid_p = jax.block_until_ready(
        fwd_pallas(x_in, prev_hidden, supports, params))
    res_r, out_r, hid_r = fwd_ref(x_in, prev_hidden, supports, params)

    assert res_p.shape == (N, V, L, hidden), res_p.shape
    assert out_p.shape == (N, V, L, out_dim), out_p.shape
    assert len(hid_p) == layers and hid_p[0].shape == (N, V, L, hidden)
    for pa, rb in [(res_p, res_r), (out_p, out_r), (hid_p[-1], hid_r[-1])]:
        err = float(jnp.max(jnp.abs(pa - rb)))
        assert err < 7.5e-2, f"full-model mismatch: {err}"
        assert bool(jnp.all(jnp.isfinite(pa)))

    print("KERNEL_OK")
</pallas_src>

<mosaic_0001>
module attributes {stable_mosaic.version = 11 : i64} {
  func.func @_gcn_res_ln_kernel(%arg0: i32, %arg1: memref<1x128x32xf32, #tpu.memory_space<vmem>>, %arg2: memref<512x128xbf16, #tpu.memory_space<vmem>>, %arg3: memref<5x32x32xbf16, #tpu.memory_space<vmem>>, %arg4: memref<1x32xf32, #tpu.memory_space<vmem>>, %arg5: memref<1x32xf32, #tpu.memory_space<vmem>>, %arg6: memref<1x32xf32, #tpu.memory_space<vmem>>, %arg7: memref<1x128x32xf32, #tpu.memory_space<vmem>>) attributes {dimension_semantics = [#tpu.dimension_semantics<parallel>], iteration_bounds = array<i64: 2>, scalar_prefetch = 0 : i64, scratch_operands = 0 : i64, tpu.core_type = #tpu.core_type<tc>, window_params = [{transform_indices = @transform_0, window_bounds = array<i64: 1, 128, 32>}, {pipeline_mode = #tpu.pipeline_mode<synchronous>, transform_indices = @transform_1, window_bounds = array<i64: 512, 128>}, {pipeline_mode = #tpu.pipeline_mode<synchronous>, transform_indices = @transform_2, window_bounds = array<i64: 5, 32, 32>}, {pipeline_mode = #tpu.pipeline_mode<synchronous>, transform_indices = @transform_3, window_bounds = array<i64: 1, 32>}, {pipeline_mode = #tpu.pipeline_mode<synchronous>, transform_indices = @transform_4, window_bounds = array<i64: 1, 32>}, {pipeline_mode = #tpu.pipeline_mode<synchronous>, transform_indices = @transform_5, window_bounds = array<i64: 1, 32>}, {transform_indices = @transform_6, window_bounds = array<i64: 1, 128, 32>}]} {
    %c0 = arith.constant 0 : index
    %c0_0 = arith.constant 0 : index
    %0 = vector.load %arg2[%c0, %c0_0] : memref<512x128xbf16, #tpu.memory_space<vmem>>, vector<512x128xbf16>
    %c0_1 = arith.constant 0 : index
    %c0_2 = arith.constant 0 : index
    %1 = vector.load %arg4[%c0_1, %c0_2] : memref<1x32xf32, #tpu.memory_space<vmem>>, vector<1x32xf32>
    %c0_3 = arith.constant 0 : index
    %c0_4 = arith.constant 0 : index
    %2 = vector.load %arg5[%c0_3, %c0_4] : memref<1x32xf32, #tpu.memory_space<vmem>>, vector<1x32xf32>
    %c0_5 = arith.constant 0 : index
    %c0_6 = arith.constant 0 : index
    %3 = vector.load %arg6[%c0_5, %c0_6] : memref<1x32xf32, #tpu.memory_space<vmem>>, vector<1x32xf32>
    %c0_7 = arith.constant 0 : index
    %c0_8 = arith.constant 0 : index
    %c0_9 = arith.constant 0 : index
    %4 = vector.load %arg1[%c0_7, %c0_8, %c0_9] : memref<1x128x32xf32, #tpu.memory_space<vmem>>, vector<1x128x32xf32>
    %5 = vector.shape_cast %4 : vector<1x128x32xf32> to vector<128x32xf32>
    %6 = arith.truncf %5 : vector<128x32xf32> to vector<128x32xbf16>
    %cst = arith.constant dense<0.000000e+00> : vector<512x32xf32>
    %7 = tpu.matmul %0, %6, %cst {dimension_numbers = #tpu.dot_dimension_numbers<[1], [0], [0], [1], [0, 0, 1, 1], [], []>} : vector<512x128xbf16>, vector<128x32xbf16>, vector<512x32xf32> -> vector<512x32xf32>
    %c0_10 = arith.constant 0 : index
    %c0_11 = arith.constant 0 : index
    %c0_12 = arith.constant 0 : index
    %8 = vector.load %arg3[%c0_10, %c0_11, %c0_12] : memref<5x32x32xbf16, #tpu.memory_space<vmem>>, vector<1x32x32xbf16>
    %9 = vector.shape_cast %8 : vector<1x32x32xbf16> to vector<32x32xbf16>
    %cst_13 = arith.constant dense<0.000000e+00> : vector<128x32xf32>
    %10 = tpu.matmul %6, %9, %cst_13 {dimension_numbers = #tpu.dot_dimension_numbers<[1], [0], [0], [1], [0, 0, 1, 1], [], []>} : vector<128x32xbf16>, vector<32x32xbf16>, vector<128x32xf32> -> vector<128x32xf32>
    %11 = vector.extract_strided_slice %7 {offsets = [0, 0], sizes = [128, 32], strides = [1, 1]} : vector<512x32xf32> to vector<128x32xf32>
    %12 = arith.truncf %11 : vector<128x32xf32> to vector<128x32xbf16>
    %c1 = arith.constant 1 : index
    %c0_14 = arith.constant 0 : index
    %c0_15 = arith.constant 0 : index
    %13 = vector.load %arg3[%c1, %c0_14, %c0_15] : memref<5x32x32xbf16, #tpu.memory_space<vmem>>, vector<1x32x32xbf16>
    %14 = vector.shape_cast %13 : vector<1x32x32xbf16> to vector<32x32xbf16>
    %cst_16 = arith.constant dense<0.000000e+00> : vector<128x32xf32>
    %15 = tpu.matmul %12, %14, %cst_16 {dimension_numbers = #tpu.dot_dimension_numbers<[1], [0], [0], [1], [0, 0, 1, 1], [], []>} : vector<128x32xbf16>, vector<32x32xbf16>, vector<128x32xf32> -> vector<128x32xf32>
    %16 = arith.addf %10, %15 : vector<128x32xf32>
    %17 = vector.extract_strided_slice %7 {offsets = [128, 0], sizes = [128, 32], strides = [1, 1]} : vector<512x32xf32> to vector<128x32xf32>
    %18 = arith.truncf %17 : vector<128x32xf32> to vector<128x32xbf16>
    %c2 = arith.constant 2 : index
    %c0_17 = arith.constant 0 : index
    %c0_18 = arith.constant 0 : index
    %19 = vector.load %arg3[%c2, %c0_17, %c0_18] : memref<5x32x32xbf16, #tpu.memory_space<vmem>>, vector<1x32x32xbf16>
    %20 = vector.shape_cast %19 : vector<1x32x32xbf16> to vector<32x32xbf16>
    %cst_19 = arith.constant dense<0.000000e+00> : vector<128x32xf32>
    %21 = tpu.matmul %18, %20, %cst_19 {dimension_numbers = #tpu.dot_dimension_numbers<[1], [0], [0], [1], [0, 0, 1, 1], [], []>} : vector<128x32xbf16>, vector<32x32xbf16>, vector<128x32xf32> -> vector<128x32xf32>
    %22 = arith.addf %16, %21 : vector<128x32xf32>
    %23 = vector.extract_strided_slice %7 {offsets = [256, 0], sizes = [128, 32], strides = [1, 1]} : vector<512x32xf32> to vector<128x32xf32>
    %24 = arith.truncf %23 : vector<128x32xf32> to vector<128x32xbf16>
    %c3 = arith.constant 3 : index
    %c0_20 = arith.constant 0 : index
    %c0_21 = arith.constant 0 : index
    %25 = vector.load %arg3[%c3, %c0_20, %c0_21] : memref<5x32x32xbf16, #tpu.memory_space<vmem>>, vector<1x32x32xbf16>
    %26 = vector.shape_cast %25 : vector<1x32x32xbf16> to vector<32x32xbf16>
    %cst_22 = arith.constant dense<0.000000e+00> : vector<128x32xf32>
    %27 = tpu.matmul %24, %26, %cst_22 {dimension_numbers = #tpu.dot_dimension_numbers<[1], [0], [0], [1], [0, 0, 1, 1], [], []>} : vector<128x32xbf16>, vector<32x32xbf16>, vector<128x32xf32> -> vector<128x32xf32>
    %28 = arith.addf %22, %27 : vector<128x32xf32>
    %29 = vector.extract_strided_slice %7 {offsets = [384, 0], sizes = [128, 32], strides = [1, 1]} : vector<512x32xf32> to vector<128x32xf32>
    %30 = arith.truncf %29 : vector<128x32xf32> to vector<128x32xbf16>
    %c4 = arith.constant 4 : index
    %c0_23 = arith.constant 0 : index
    %c0_24 = arith.constant 0 : index
    %31 = vector.load %arg3[%c4, %c0_23, %c0_24] : memref<5x32x32xbf16, #tpu.memory_space<vmem>>, vector<1x32x32xbf16>
    %32 = vector.shape_cast %31 : vector<1x32x32xbf16> to vector<32x32xbf16>
    %cst_25 = arith.constant dense<0.000000e+00> : vector<128x32xf32>
    %33 = tpu.matmul %30, %32, %cst_25 {dimension_numbers = #tpu.dot_dimension_numbers<[1], [0], [0], [1], [0, 0, 1, 1], [], []>} : vector<128x32xbf16>, vector<32x32xbf16>, vector<128x32xf32> -> vector<128x32xf32>
    %34 = arith.addf %28, %33 : vector<128x32xf32>
    %35 = vector.broadcast %1 : vector<1x32xf32> to vector<128x32xf32>
    %36 = arith.addf %34, %35 : vector<128x32xf32>
    %37 = arith.addf %36, %5 : vector<128x32xf32>
    %cst_26 = arith.constant dense<0.000000e+00> : vector<128xf32>
    %38 = vector.multi_reduction <add>, %37, %cst_26 [1] : vector<128x32xf32> to vector<128xf32>
    %39 = vector.shape_cast %38 : vector<128xf32> to vector<128x1xf32>
    %cst_27 = arith.constant 3.200000e+01 : f32
    %40 = vector.broadcast %cst_27 : f32 to vector<128x1xf32>
    %41 = arith.divf %39, %40 : vector<128x1xf32>
    %42 = vector.broadcast %41 : vector<128x1xf32> to vector<128x32xf32>
    %43 = arith.subf %37, %42 : vector<128x32xf32>
    %44 = arith.mulf %43, %43 : vector<128x32xf32>
    %cst_28 = arith.constant dense<0.000000e+00> : vector<128xf32>
    %45 = vector.multi_reduction <add>, %44, %cst_28 [1] : vector<128x32xf32> to vector<128xf32>
    %46 = vector.shape_cast %45 : vector<128xf32> to vector<128x1xf32>
    %cst_29 = arith.constant 3.200000e+01 : f32
    %47 = vector.broadcast %cst_29 : f32 to vector<128x1xf32>
    %48 = arith.divf %46, %47 : vector<128x1xf32>
    %49 = math.sqrt %48 : vector<128x1xf32>
    %50 = vector.broadcast %41 : vector<128x1xf32> to vector<128x32xf32>
    %51 = arith.subf %37, %50 : vector<128x32xf32>
    %cst_30 = arith.constant 9.99999997E-7 : f32
    %52 = vector.broadcast %cst_30 : f32 to vector<128x1xf32>
    %53 = arith.addf %49, %52 : vector<128x1xf32>
    %54 = vector.broadcast %53 : vector<128x1xf32> to vector<128x32xf32>
    %55 = arith.divf %51, %54 : vector<128x32xf32>
    %56 = vector.broadcast %2 : vector<1x32xf32> to vector<128x32xf32>
    %57 = arith.mulf %55, %56 : vector<128x32xf32>
    %58 = vector.broadcast %3 : vector<1x32xf32> to vector<128x32xf32>
    %59 = arith.addf %57, %58 : vector<128x32xf32>
    %c0_31 = arith.constant 0 : index
    %c0_32 = arith.constant 0 : index
    %c0_33 = arith.constant 0 : index
    %60 = vector.load %arg7[%c0_31, %c0_32, %c0_33] : memref<1x128x32xf32, #tpu.memory_space<vmem>>, vector<1x128x32xf32>
    %61 = vector.shape_cast %60 : vector<1x128x32xf32> to vector<128x32xf32>
    %62 = vector.shape_cast %59 : vector<128x32xf32> to vector<1x128x32xf32>
    tpu.vector_store %arg7[%c0_31, %c0_32, %c0_33], %62 {strides = array<i32>} : memref<1x128x32xf32, #tpu.memory_space<vmem>>, vector<1x128x32xf32>,
    return
  }
  func.func @transform_0(%arg0: i32) -> (i32, i32, i32) {
    %c0_i32 = arith.constant 0 : i32
    %c0_i32_0 = arith.constant 0 : i32
    %c0_i32_1 = arith.constant 0 : i32
    return %arg0, %c0_i32, %c0_i32_0 : i32, i32, i32
  }
  func.func @transform_1(%arg0: i32) -> (i32, i32) {
    %c0_i32 = arith.constant 0 : i32
    %c0_i32_0 = arith.constant 0 : i32
    %c0_i32_1 = arith.constant 0 : i32
    return %c0_i32, %c0_i32_0 : i32, i32
  }
  func.func @transform_2(%arg0: i32) -> (i32, i32, i32) {
    %c0_i32 = arith.constant 0 : i32
    %c0_i32_0 = arith.constant 0 : i32
    %c0_i32_1 = arith.constant 0 : i32
    %c0_i32_2 = arith.constant 0 : i32
    return %c0_i32, %c0_i32_0, %c0_i32_1 : i32, i32, i32
  }
  func.func @transform_3(%arg0: i32) -> (i32, i32) {
    %c0_i32 = arith.constant 0 : i32
    %c0_i32_0 = arith.constant 0 : i32
    %c0_i32_1 = arith.constant 0 : i32
    return %c0_i32, %c0_i32_0 : i32, i32
  }
  func.func @transform_4(%arg0: i32) -> (i32, i32) {
    %c0_i32 = arith.constant 0 : i32
    %c0_i32_0 = arith.constant 0 : i32
    %c0_i32_1 = arith.constant 0 : i32
    return %c0_i32, %c0_i32_0 : i32, i32
  }
  func.func @transform_5(%arg0: i32) -> (i32, i32) {
    %c0_i32 = arith.constant 0 : i32
    %c0_i32_0 = arith.constant 0 : i32
    %c0_i32_1 = arith.constant 0 : i32
    return %c0_i32, %c0_i32_0 : i32, i32
  }
  func.func @transform_6(%arg0: i32) -> (i32, i32, i32) {
    %c0_i32 = arith.constant 0 : i32
    %c0_i32_0 = arith.constant 0 : i32
    %c0_i32_1 = arith.constant 0 : i32
    return %arg0, %c0_i32, %c0_i32_0 : i32, i32, i32
  }
}

</mosaic_0001>

<llo_original>
// kernel: tpu_custom_call.1
$region0: #{tpu_custom_call.1}
  #allocation0 [shape = 'u32[]', space=smem, size = 0x4, offset = 0x4, fixed_abs, tag = 'smem constant byte address 0x4 - core index']
  #allocation1 [shape = 'u32[72,128]{1,0:T(1,128)}', space=vmem, size = 0x9000, scoped, tag = 'internal scratch']
  %s0 = inlined_call_operand.vmem [shape: f32[2,128,32], index: 0, kind: input, shape index: {}]
  %s1 = inlined_call_operand.vmem [shape: bf16[512,128], index: 1, kind: input, shape index: {}]
  %s2 = inlined_call_operand.hbm [shape: bf16[5,32,32], index: 2, kind: input, shape index: {}]
  %s3 = inlined_call_operand.vmem [shape: f32[1,32], index: 3, kind: input, shape index: {}]
  %s4 = inlined_call_operand.vmem [shape: f32[1,32], index: 4, kind: input, shape index: {}]
  %s5 = inlined_call_operand.vmem [shape: f32[1,32], index: 5, kind: input, shape index: {}]
  %s6 = inlined_call_operand.vmem [shape: f32[2,128,32], index: 6, kind: output, shape index: {}]
  %s7 = sld [smem:[#allocation0]]
  $region61: #{tpu_custom_call.1} parent=0
    _
  %s9 = ssub.s32 1, %s7
  %s10 = scalar_select 0, %s9, %s7
  $region1: #{tpu_custom_call.1} parent=0
    #allocation2 [shape = 'u8[40960]{0}', space=vmem, size = 0xa000, scoped, tag = 'input window, operand 2, single buffered']
    #allocation3 [shape = 's32[2]{0}', space=sflag, size = 0x8, scoped, tag = 'scoped memory for tpu_custom_call.1']
    %11 = vsyncpa [#allocation3], 0
    loop: start=0, step=1, limit=4
    $region2: #{tpu_custom_call.1} parent=1 // loop_pre_header
      _
    $region3: #{tpu_custom_call.1} parent=1 // loop_header
      %s13 = sphi 0, %s17
      %p14 = scmp.ge.s32.totalorder %s13, 4
      %s23 = sphi 0, %s25
      %s26 = sphi 0, %s23
      %s27 = sphi 0, %s26
      %s43 = sphi 0, %s27
      %s47 = sphi 0, %s47
      %s49 = sphi 0, %s47
      %s50 = sphi 0, %s49
      %s64 = sphi 0, %s50
      %s68 = sphi 0, %s68
      %s70 = sphi 0, %s68
      %s71 = sphi 0, %s70
      %s85 = sphi 0, %s71
      %s89 = sphi 0, %s89
      %s91 = sphi 0, %s89
      %s92 = sphi 0, %s91
      %s106 = sphi 0, %s92
      %s110 = sphi 0, %s110
      %s112 = sphi 0, %s110
      %s113 = sphi 0, %s112
      %s127 = sphi 0, %s113
      %s131 = sphi 0, %s131
      %s133 = sphi 0, %s131
      %s134 = sphi 0, %s133
      %s148 = sphi 0, %s134
      %s154 = sphi 0, %s156
      %s157 = sphi 0, %s154
      %s158 = sphi 0, %s157
      %s174 = sphi 0, %s158
    $region4: #{tpu_custom_call.1} parent=1 // loop_header_branch
      %16 = sbr.rel (%p14) target = $region8
    $region5: #{tpu_custom_call.1} parent=1 // loop_body
      %s18 = ssub.s32 %s13, 1
      %s19 = ssub.s32 %s13, 2
      %s20 = sadd.s32 %s13, 1
      %s21 = ssub.s32 %s13, %s20
      %p22 = scmp.eq.s32.totalorder %s21, 0
      %s24 = sadd.s32 %s23, 1
      %s25 = scalar_select %p22, %s23, %s24
      %p28 = pneg %p22
      %p29 = scmp.eq.s32.totalorder %s13, 1
      %p30 = por %p28, %p29
      %p31 = scmp.ne.s32.totalorder %s23, %s26
      %p32 = scmp.eq.s32.totalorder %s13, 0
      %p33 = por %p31, %p32
      %p34 = scmp.ne.s32.totalorder %s23, %s26
      %p35 = scmp.eq.s32.totalorder %s18, 1
      %p36 = por %p34, %p35
      %p37 = scmp.ne.s32.totalorder %s26, %s27
      %p38 = scmp.eq.s32.totalorder %s18, 0
      %p39 = por %p37, %p38
      %p40 = scmp.ne.s32.totalorder %s26, %s27
      %p41 = scmp.eq.s32.totalorder %s19, 1
      %p42 = por %p40, %p41
      %p44 = scmp.ne.s32.totalorder %s27, %s43
      %p45 = scmp.eq.s32.totalorder %s19, 0
      %p46 = por %p44, %p45
      %s48 = sadd.s32 %s47, 1
      %p51 = scmp.eq.s32.totalorder %s13, 1
      %p52 = scmp.ne.s32.totalorder %s47, %s49
      %p53 = scmp.eq.s32.totalorder %s13, 0
      %p54 = por %p52, %p53
      %p55 = scmp.ne.s32.totalorder %s47, %s49
      %p56 = scmp.eq.s32.totalorder %s18, 1
      %p57 = por %p55, %p56
      %p58 = scmp.ne.s32.totalorder %s49, %s50
      %p59 = scmp.eq.s32.totalorder %s18, 0
      %p60 = por %p58, %p59
      %p61 = scmp.ne.s32.totalorder %s49, %s50
      %p62 = scmp.eq.s32.totalorder %s19, 1
      %p63 = por %p61, %p62
      %p65 = scmp.ne.s32.totalorder %s50, %s64
      %p66 = scmp.eq.s32.totalorder %s19, 0
      %p67 = por %p65, %p66
      %s69 = sadd.s32 %s68, 1
      %p72 = scmp.eq.s32.totalorder %s13, 1
      %p73 = scmp.ne.s32.totalorder %s68, %s70
      %p74 = scmp.eq.s32.totalorder %s13, 0
      %p75 = por %p73, %p74
      %p76 = scmp.ne.s32.totalorder %s68, %s70
      %p77 = scmp.eq.s32.totalorder %s18, 1
      %p78 = por %p76, %p77
      %p79 = scmp.ne.s32.totalorder %s70, %s71
      %p80 = scmp.eq.s32.totalorder %s18, 0
      %p81 = por %p79, %p80
      %p82 = scmp.ne.s32.totalorder %s70, %s71
      %p83 = scmp.eq.s32.totalorder %s19, 1
      %p84 = por %p82, %p83
      %p86 = scmp.ne.s32.totalorder %s71, %s85
      %p87 = scmp.eq.s32.totalorder %s19, 0
      %p88 = por %p86, %p87
      %s90 = sadd.s32 %s89, 1
      %p93 = scmp.eq.s32.totalorder %s13, 1
      %p94 = scmp.ne.s32.totalorder %s89, %s91
      %p95 = scmp.eq.s32.totalorder %s13, 0
      %p96 = por %p94, %p95
      %p97 = scmp.ne.s32.totalorder %s89, %s91
      %p98 = scmp.eq.s32.totalorder %s18, 1
      %p99 = por %p97, %p98
      %p100 = scmp.ne.s32.totalorder %s91, %s92
      %p101 = scmp.eq.s32.totalorder %s18, 0
      %p102 = por %p100, %p101
      %p103 = scmp.ne.s32.totalorder %s91, %s92
      %p104 = scmp.eq.s32.totalorder %s19, 1
      %p105 = por %p103, %p104
      %p107 = scmp.ne.s32.totalorder %s92, %s106
      %p108 = scmp.eq.s32.totalorder %s19, 0
      %p109 = por %p107, %p108
      %s111 = sadd.s32 %s110, 1
      %p114 = scmp.eq.s32.totalorder %s13, 1
      %p115 = scmp.ne.s32.totalorder %s110, %s112
      %p116 = scmp.eq.s32.totalorder %s13, 0
      %p117 = por %p115, %p116
      %p118 = scmp.ne.s32.totalorder %s110, %s112
      %p119 = scmp.eq.s32.totalorder %s18, 1
      %p120 = por %p118, %p119
      %p121 = scmp.ne.s32.totalorder %s112, %s113
      %p122 = scmp.eq.s32.totalorder %s18, 0
      %p123 = por %p121, %p122
      %p124 = scmp.ne.s32.totalorder %s112, %s113
      %p125 = scmp.eq.s32.totalorder %s19, 1
      %p126 = por %p124, %p125
      %p128 = scmp.ne.s32.totalorder %s113, %s127
      %p129 = scmp.eq.s32.totalorder %s19, 0
      %p130 = por %p128, %p129
      %s132 = sadd.s32 %s131, 1
      %p135 = scmp.eq.s32.totalorder %s13, 1
      %p136 = scmp.ne.s32.totalorder %s131, %s133
      %p137 = scmp.eq.s32.totalorder %s13, 0
      %p138 = por %p136, %p137
      %p139 = scmp.ne.s32.totalorder %s131, %s133
      %p140 = scmp.eq.s32.totalorder %s18, 1
      %p141 = por %p139, %p140
      %p142 = scmp.ne.s32.totalorder %s133, %s134
      %p143 = scmp.eq.s32.totalorder %s18, 0
      %p144 = por %p142, %p143
      %p145 = scmp.ne.s32.totalorder %s133, %s134
      %p146 = scmp.eq.s32.totalorder %s19, 1
      %p147 = por %p145, %p146
      %p149 = scmp.ne.s32.totalorder %s134, %s148
      %p150 = scmp.eq.s32.totalorder %s19, 0
      %p151 = por %p149, %p150
      %s152 = ssub.s32 %s13, %s20
      %p153 = scmp.eq.s32.totalorder %s152, 0
      %s155 = sadd.s32 %s154, 1
      %s156 = scalar_select %p153, %s154, %s155
      %p159 = pneg %p153
      %p160 = scmp.eq.s32.totalorder %s13, 1
      %p161 = por %p159, %p160
      %p162 = scmp.ne.s32.totalorder %s154, %s157
      %p163 = scmp.eq.s32.totalorder %s13, 0
      %p164 = por %p162, %p163
      %p165 = scmp.ne.s32.totalorder %s154, %s157
      %p166 = scmp.eq.s32.totalorder %s18, 1
      %p167 = por %p165, %p166
      %p168 = scmp.ne.s32.totalorder %s157, %s158
      %p169 = scmp.eq.s32.totalorder %s18, 0
      %p170 = por %p168, %p169
      %p171 = scmp.ne.s32.totalorder %s157, %s158
      %p172 = scmp.eq.s32.totalorder %s19, 1
      %p173 = por %p171, %p172
      %p175 = scmp.ne.s32.totalorder %s158, %s174
      %p176 = scmp.eq.s32.totalorder %s19, 0
      %p177 = por %p175, %p176
      %p178 = scmp.le.s32.totalorder 1, %s13
      %p179 = scmp.lt.s32.totalorder %s13, 3
      %p180 = pnand %p178, %p179
      %p181 = pneg %p180
      // Predicated region
      $region9: #{tpu_custom_call.1} parent=5 // pred_check
        _
      $region10: #{tpu_custom_call.1} parent=5 // pred_check_branch
        %183 = sbr.rel (%p180) target = $region12
      $region11: #{tpu_custom_call.1} parent=5 // pred_region
        %s184 = ssub.s32 %s13, 1
        // Predicated region
        $region13: #{tpu_custom_call.1} parent=11 // pred_check
          %p185 = pneg %p60
        $region14: #{tpu_custom_call.1} parent=11 // pred_check_branch
          %187 = sbr.rel (%p185) target = $region16
        $region15: #{tpu_custom_call.1} parent=11 // pred_region
          _
        $region16: #{tpu_custom_call.1} parent=11 // pred_fallthru
          _
        // Predicated region
        $region17: #{tpu_custom_call.1} parent=11 // pred_check
          %p188 = pneg %p81
        $region18: #{tpu_custom_call.1} parent=11 // pred_check_branch
          %190 = sbr.rel (%p188) target = $region20
        $region19: #{tpu_custom_call.1} parent=11 // pred_region
          %192 = vsyncadd [#allocation3], 0
          %s193 = sshll.u32 %s2, 4
          %s194 = int_to_ptr.hbm [resolvable:$true] %s193
          %s195 = sshll.u32 [#allocation2], 4
          %s196 = int_to_ptr.vmem [resolvable:$true] %s195
          %201 = dma.hbm_to_vmem [thread:$0]  %s194, 1280, %s196, [#allocation3], 64, 64, 4
        $region20: #{tpu_custom_call.1} parent=11 // pred_fallthru
          _
        // Predicated region
        $region21: #{tpu_custom_call.1} parent=11 // pred_check
          %p202 = pneg %p102
        $region22: #{tpu_custom_call.1} parent=11 // pred_check_branch
          %204 = sbr.rel (%p202) target = $region24
        $region23: #{tpu_custom_call.1} parent=11 // pred_region
          _
        $region24: #{tpu_custom_call.1} parent=11 // pred_fallthru
          _
        // Predicated region
        $region25: #{tpu_custom_call.1} parent=11 // pred_check
          %p205 = pneg %p123
        $region26: #{tpu_custom_call.1} parent=11 // pred_check_branch
          %207 = sbr.rel (%p205) target = $region28
        $region27: #{tpu_custom_call.1} parent=11 // pred_region
          _
        $region28: #{tpu_custom_call.1} parent=11 // pred_fallthru
          _
        // Predicated region
        $region29: #{tpu_custom_call.1} parent=11 // pred_check
          %p208 = pneg %p144
        $region30: #{tpu_custom_call.1} parent=11 // pred_check_branch
          %210 = sbr.rel (%p208) target = $region32
        $region31: #{tpu_custom_call.1} parent=11 // pred_region
          _
        $region32: #{tpu_custom_call.1} parent=11 // pred_fallthru
          _
      $region12: #{tpu_custom_call.1} parent=5 // pred_fallthru
        _
      %p211 = scmp.lt.s32.totalorder %s13, 2
      // Predicated region
      $region33: #{tpu_custom_call.1} parent=5 // pred_check
        %p212 = pneg %p211
      $region34: #{tpu_custom_call.1} parent=5 // pred_check_branch
        %214 = sbr.rel (%p212) target = $region36
      $region35: #{tpu_custom_call.1} parent=5 // pred_region
        // Predicated region
        $region37: #{tpu_custom_call.1} parent=35 // pred_check
          %p215 = pneg %p33
        $region38: #{tpu_custom_call.1} parent=35 // pred_check_branch
          %217 = sbr.rel (%p215) target = $region40
        $region39: #{tpu_custom_call.1} parent=35 // pred_region
          %p218 = scmp.lt.s32.totalorder %s13, 1
          %s219 = scalar_select %p218, %s13, 1
          %s220 = smul.addr %s219, 16
          %s221 = smul.addr %s220, 8
          %s222 = scalar_lea.vmem %s0, %s221
        $region40: #{tpu_custom_call.1} parent=35 // pred_fallthru
          _
      $region36: #{tpu_custom_call.1} parent=5 // pred_fallthru
        _
      %p223 = scmp.le.s32.totalorder 1, %s13
      %p224 = scmp.lt.s32.totalorder %s13, 3
      %p225 = pnand %p223, %p224
      %p226 = pneg %p225
      // Predicated region
      $region41: #{tpu_custom_call.1} parent=5 // pred_check
        _
      $region42: #{tpu_custom_call.1} parent=5 // pred_check_branch
        %228 = sbr.rel (%p225) target = $region44
      $region43: #{tpu_custom_call.1} parent=5 // pred_region
        %s229 = ssub.s32 %s13, 1
        // Predicated region
        $region45: #{tpu_custom_call.1} parent=43 // pred_check
          %p230 = pneg %p81
        $region46: #{tpu_custom_call.1} parent=43 // pred_check_branch
          %232 = sbr.rel (%p230) target = $region48
        $region47: #{tpu_custom_call.1} parent=43 // pred_region
          %234 = dma.done [#allocation3], 1280
        $region48: #{tpu_custom_call.1} parent=43 // pred_fallthru
          _
        %p235 = scmp.lt.s32.totalorder %s18, 1
        %s236 = scalar_select %p235, %s18, 1
        %s237 = smul.addr %s236, 16
        %s238 = smul.addr %s237, 8
        %s239 = scalar_lea.vmem %s0, %s238
        %p240 = pneg %p39
        %p241 = pneg %p36
        %p242 = pneg %p60
        %p243 = pneg %p57
        %p244 = pneg %p81
        %p245 = pneg %p78
        %p246 = pneg %p102
        %p247 = pneg %p99
        %p248 = pneg %p123
        %p249 = pneg %p120
        %p250 = pneg %p144
        %p251 = pneg %p141
        %p252 = pneg %p170
        %p253 = pneg %p167
        %p254 = scmp.lt.s32.totalorder %s18, 1
        %s255 = scalar_select %p254, %s18, 1
        %s256 = smul.addr %s255, 16
        %s257 = smul.addr %s256, 8
        %s258 = scalar_lea.vmem %s6, %s257
        %p259 = scmp.lt.s32.totalorder %s18, 1
        %s260 = scalar_select %p259, %s18, 1
        %s261 = smul.addr %s260, 16
        %s262 = smul.addr %s261, 8
        %s263 = scalar_lea.vmem %s0, %s262
        %p264 = scmp.lt.s32.totalorder %s18, 1
        %s265 = scalar_select %p264, %s18, 1
        %s266 = smul.addr %s265, 16
        %s267 = smul.addr %s266, 8
        %s268 = scalar_lea.vmem %s6, %s267
        %v270 = vld [vmem:[%s1] sm:$0xf]
        %v271 = vld [vmem:[%s1 + $0x4] sm:$0xf]
        %v272 = vld [vmem:[%s1 + $0x8] sm:$0xf]
        %v273 = vld [vmem:[%s1 + $0xc] sm:$0xf]
        %v274 = vld [vmem:[%s1 + $0x10] sm:$0xf]
        %v275 = vld [vmem:[%s1 + $0x14] sm:$0xf]
        %v276 = vld [vmem:[%s1 + $0x18] sm:$0xf]
        %v277 = vld [vmem:[%s1 + $0x1c] sm:$0xf]
        %v278 = vld [vmem:[%s1 + $0x20] sm:$0xf]
        %v279 = vld [vmem:[%s1 + $0x24] sm:$0xf]
        %v280 = vld [vmem:[%s1 + $0x28] sm:$0xf]
        %v281 = vld [vmem:[%s1 + $0x2c] sm:$0xf]
        %v282 = vld [vmem:[%s1 + $0x30] sm:$0xf]
        %v283 = vld [vmem:[%s1 + $0x34] sm:$0xf]
        %v284 = vld [vmem:[%s1 + $0x38] sm:$0xf]
        %v285 = vld [vmem:[%s1 + $0x3c] sm:$0xf]
        %v286 = vld [vmem:[%s1 + $0x40] sm:$0xf]
        %v287 = vld [vmem:[%s1 + $0x44] sm:$0xf]
        %v288 = vld [vmem:[%s1 + $0x48] sm:$0xf]
        %v289 = vld [vmem:[%s1 + $0x4c] sm:$0xf]
        %v290 = vld [vmem:[%s1 + $0x50] sm:$0xf]
        %v291 = vld [vmem:[%s1 + $0x54] sm:$0xf]
        %v292 = vld [vmem:[%s1 + $0x58] sm:$0xf]
        %v293 = vld [vmem:[%s1 + $0x5c] sm:$0xf]
        %v294 = vld [vmem:[%s1 + $0x60] sm:$0xf]
        %v295 = vld [vmem:[%s1 + $0x64] sm:$0xf]
        %v296 = vld [vmem:[%s1 + $0x68] sm:$0xf]
        %v297 = vld [vmem:[%s1 + $0x6c] sm:$0xf]
        %v298 = vld [vmem:[%s1 + $0x70] sm:$0xf]
        %v299 = vld [vmem:[%s1 + $0x74] sm:$0xf]
        %v300 = vld [vmem:[%s1 + $0x78] sm:$0xf]
        %v301 = vld [vmem:[%s1 + $0x7c] sm:$0xf]
        %v302 = vld [vmem:[%s1 + $0x80] sm:$0xf]
        %v303 = vld [vmem:[%s1 + $0x84] sm:$0xf]
        %v304 = vld [vmem:[%s1 + $0x88] sm:$0xf]
        %v305 = vld [vmem:[%s1 + $0x8c] sm:$0xf]
        %v306 = vld [vmem:[%s1 + $0x90] sm:$0xf]
        %v307 = vld [vmem:[%s1 + $0x94] sm:$0xf]
        %v308 = vld [vmem:[%s1 + $0x98] sm:$0xf]
        %v309 = vld [vmem:[%s1 + $0x9c] sm:$0xf]
        %v310 = vld [vmem:[%s1 + $0xa0] sm:$0xf]
        %v311 = vld [vmem:[%s1 + $0xa4] sm:$0xf]
        %v312 = vld [vmem:[%s1 + $0xa8] sm:$0xf]
        %v313 = vld [vmem:[%s1 + $0xac] sm:$0xf]
        %v314 = vld [vmem:[%s1 + $0xb0] sm:$0xf]
        %v315 = vld [vmem:[%s1 + $0xb4] sm:$0xf]
        %v316 = vld [vmem:[%s1 + $0xb8] sm:$0xf]
        %v317 = vld [vmem:[%s1 + $0xbc] sm:$0xf]
        %v318 = vld [vmem:[%s1 + $0xc0] sm:$0xf]
        %v319 = vld [vmem:[%s1 + $0xc4] sm:$0xf]
        %v320 = vld [vmem:[%s1 + $0xc8] sm:$0xf]
        %v321 = vld [vmem:[%s1 + $0xcc] sm:$0xf]
        %v322 = vld [vmem:[%s1 + $0xd0] sm:$0xf]
        %v323 = vld [vmem:[%s1 + $0xd4] sm:$0xf]
        %v324 = vld [vmem:[%s1 + $0xd8] sm:$0xf]
        %v325 = vld [vmem:[%s1 + $0xdc] sm:$0xf]
        %v326 = vld [vmem:[%s1 + $0xe0] sm:$0xf]
        %v327 = vld [vmem:[%s1 + $0xe4] sm:$0xf]
        %v328 = vld [vmem:[%s1 + $0xe8] sm:$0xf]
        %v329 = vld [vmem:[%s1 + $0xec] sm:$0xf]
        %v330 = vld [vmem:[%s1 + $0xf0] sm:$0xf]
        %v331 = vld [vmem:[%s1 + $0xf4] sm:$0xf]
        %v332 = vld [vmem:[%s1 + $0xf8] sm:$0xf]
        %v333 = vld [vmem:[%s1 + $0xfc] sm:$0xf]
        %v334 = vld [vmem:[%s3] sm:$0x1]
        %v335 = vld [vmem:[%s4] sm:$0x1]
        %v336 = vld [vmem:[%s5] sm:$0x1]
        %v337 = vld [vmem:[%s263] sm:$0xff]
        %v338 = vld [vmem:[%s263 + $0x8] sm:$0xff]
        %v339 = vld [vmem:[%s263 + $0x10] sm:$0xff]
        %v340 = vld [vmem:[%s263 + $0x18] sm:$0xff]
        %v341 = vld [vmem:[%s263 + $0x20] sm:$0xff]
        %v342 = vld [vmem:[%s263 + $0x28] sm:$0xff]
        %v343 = vld [vmem:[%s263 + $0x30] sm:$0xff]
        %v344 = vld [vmem:[%s263 + $0x38] sm:$0xff]
        %v345 = vld [vmem:[%s263 + $0x40] sm:$0xff]
        %v346 = vld [vmem:[%s263 + $0x48] sm:$0xff]
        %v347 = vld [vmem:[%s263 + $0x50] sm:$0xff]
        %v348 = vld [vmem:[%s263 + $0x58] sm:$0xff]
        %v349 = vld [vmem:[%s263 + $0x60] sm:$0xff]
        %v350 = vld [vmem:[%s263 + $0x68] sm:$0xff]
        %v351 = vld [vmem:[%s263 + $0x70] sm:$0xff]
        %v352 = vld [vmem:[%s263 + $0x78] sm:$0xff]
        %v353 = vpack.c.bf16 %v338, %v337
        %v354 = vpack.c.bf16 %v340, %v339
        %v355 = vpack.c.bf16 %v342, %v341
        %v356 = vpack.c.bf16 %v344, %v343
        %v357 = vpack.c.bf16 %v346, %v345
        %v358 = vpack.c.bf16 %v348, %v347
        %v359 = vpack.c.bf16 %v350, %v349
        %v360 = vpack.c.bf16 %v352, %v351
        %v425 = vunpack.c.l.b16 %v270
        %v426 = vunpack.c.l.b16 %v271
        %v427 = vunpack.c.l.b16 %v272
        %v428 = vunpack.c.l.b16 %v273
        %v429 = vunpack.c.l.b16 %v274
        %v430 = vunpack.c.l.b16 %v275
        %v431 = vunpack.c.l.b16 %v276
        %v432 = vunpack.c.l.b16 %v277
        %v433 = vunpack.c.l.b16 %v278
        %v434 = vunpack.c.l.b16 %v279
        %v435 = vunpack.c.l.b16 %v280
        %v436 = vunpack.c.l.b16 %v281
        %v437 = vunpack.c.l.b16 %v282
        %v438 = vunpack.c.l.b16 %v283
        %v439 = vunpack.c.l.b16 %v284
        %v440 = vunpack.c.l.b16 %v285
        %v441 = vunpack.c.l.b16 %v286
        %v442 = vunpack.c.l.b16 %v287
        %v443 = vunpack.c.l.b16 %v288
        %v444 = vunpack.c.l.b16 %v289
        %v445 = vunpack.c.l.b16 %v290
        %v446 = vunpack.c.l.b16 %v291
        %v447 = vunpack.c.l.b16 %v292
        %v448 = vunpack.c.l.b16 %v293
        %v449 = vunpack.c.l.b16 %v294
        %v450 = vunpack.c.l.b16 %v295
        %v451 = vunpack.c.l.b16 %v296
        %v452 = vunpack.c.l.b16 %v297
        %v453 = vunpack.c.l.b16 %v298
        %v454 = vunpack.c.l.b16 %v299
        %v455 = vunpack.c.l.b16 %v300
        %v456 = vunpack.c.l.b16 %v301
        %v457 = vunpack.c.l.b16 %v302
        %v458 = vunpack.c.l.b16 %v303
        %v459 = vunpack.c.l.b16 %v304
        %v460 = vunpack.c.l.b16 %v305
        %v461 = vunpack.c.l.b16 %v306
        %v462 = vunpack.c.l.b16 %v307
        %v463 = vunpack.c.l.b16 %v308
        %v464 = vunpack.c.l.b16 %v309
        %v465 = vunpack.c.l.b16 %v310
        %v466 = vunpack.c.l.b16 %v311
        %v467 = vunpack.c.l.b16 %v312
        %v468 = vunpack.c.l.b16 %v313
        %v469 = vunpack.c.l.b16 %v314
        %v470 = vunpack.c.l.b16 %v315
        %v471 = vunpack.c.l.b16 %v316
        %v472 = vunpack.c.l.b16 %v317
        %v473 = vunpack.c.l.b16 %v318
        %v474 = vunpack.c.l.b16 %v319
        %v475 = vunpack.c.l.b16 %v320
        %v476 = vunpack.c.l.b16 %v321
        %v477 = vunpack.c.l.b16 %v322
        %v478 = vunpack.c.l.b16 %v323
        %v479 = vunpack.c.l.b16 %v324
        %v480 = vunpack.c.l.b16 %v325
        %v481 = vunpack.c.l.b16 %v326
        %v482 = vunpack.c.l.b16 %v327
        %v483 = vunpack.c.l.b16 %v328
        %v484 = vunpack.c.l.b16 %v329
        %v485 = vunpack.c.l.b16 %v330
        %v486 = vunpack.c.l.b16 %v331
        %v487 = vunpack.c.l.b16 %v332
        %v488 = vunpack.c.l.b16 %v333
        %v489 = vpack.c.b16 %v426, %v425
        %v490 = vpack.c.b16 %v428, %v427
        %v491 = vpack.c.b16 %v430, %v429
        %v492 = vpack.c.b16 %v432, %v431
        %v493 = vpack.c.b16 %v434, %v433
        %v494 = vpack.c.b16 %v436, %v435
        %v495 = vpack.c.b16 %v438, %v437
        %v496 = vpack.c.b16 %v440, %v439
        %v497 = vpack.c.b16 %v442, %v441
        %v498 = vpack.c.b16 %v444, %v443
        %v499 = vpack.c.b16 %v446, %v445
        %v500 = vpack.c.b16 %v448, %v447
        %v501 = vpack.c.b16 %v450, %v449
        %v502 = vpack.c.b16 %v452, %v451
        %v503 = vpack.c.b16 %v454, %v453
        %v504 = vpack.c.b16 %v456, %v455
        %v505 = vpack.c.b16 %v458, %v457
        %v506 = vpack.c.b16 %v460, %v459
        %v507 = vpack.c.b16 %v462, %v461
        %v508 = vpack.c.b16 %v464, %v463
        %v509 = vpack.c.b16 %v466, %v465
        %v510 = vpack.c.b16 %v468, %v467
        %v511 = vpack.c.b16 %v470, %v469
        %v512 = vpack.c.b16 %v472, %v471
        %v513 = vpack.c.b16 %v474, %v473
        %v514 = vpack.c.b16 %v476, %v475
        %v515 = vpack.c.b16 %v478, %v477
        %v516 = vpack.c.b16 %v480, %v479
        %v517 = vpack.c.b16 %v482, %v481
        %v518 = vpack.c.b16 %v484, %v483
        %v519 = vpack.c.b16 %v486, %v485
        %v520 = vpack.c.b16 %v488, %v487
        %553 = vmatpush.bf16.msra.mxu0 %v360
        %554 = vmatpush.bf16.msra.mxu0 %v359
        %555 = vmatpush.bf16.msra.mxu0 %v358
        %556 = vmatpush.bf16.msra.mxu0 %v357
        %557 = vmatpush.bf16.msra.mxu0 %v356
        %558 = vmatpush.bf16.msra.mxu0 %v355
        %559 = vmatpush.bf16.msra.mxu0 %v354
        %560 = vmatpush.bf16.msra.mxu0 %v353
        %561 = vmatmul.bf16.gmra.mxu0 %v489
        %v562 = vpop.f32.mrf.mxu0
        %v563 = vadd.f32 0.0, %v562
        %v564 = vpop.f32.mrf.mxu0
        %v565 = vadd.f32 0.0, %v564
        %566 = vmatmul.bf16.gmra.mxu0 %v490
        %v567 = vpop.f32.mrf.mxu0
        %v568 = vadd.f32 0.0, %v567
        %v569 = vpop.f32.mrf.mxu0
        %v570 = vadd.f32 0.0, %v569
        %571 = vmatmul.bf16.gmra.mxu0 %v491
        %v572 = vpop.f32.mrf.mxu0
        %v573 = vadd.f32 0.0, %v572
        %v574 = vpop.f32.mrf.mxu0
        %v575 = vadd.f32 0.0, %v574
        %576 = vmatmul.bf16.gmra.mxu0 %v492
        %v577 = vpop.f32.mrf.mxu0
        %v578 = vadd.f32 0.0, %v577
        %v579 = vpop.f32.mrf.mxu0
        %v580 = vadd.f32 0.0, %v579
        %581 = vmatmul.bf16.gmra.mxu0 %v493
        %v582 = vpop.f32.mrf.mxu0
        %v583 = vadd.f32 0.0, %v582
        %v584 = vpop.f32.mrf.mxu0
        %v585 = vadd.f32 0.0, %v584
        %586 = vmatmul.bf16.gmra.mxu0 %v494
        %v587 = vpop.f32.mrf.mxu0
        %v588 = vadd.f32 0.0, %v587
        %v589 = vpop.f32.mrf.mxu0
        %v590 = vadd.f32 0.0, %v589
        %591 = vmatmul.bf16.gmra.mxu0 %v495
        %v592 = vpop.f32.mrf.mxu0
        %v593 = vadd.f32 0.0, %v592
        %v594 = vpop.f32.mrf.mxu0
        %v595 = vadd.f32 0.0, %v594
        %596 = vmatmul.bf16.gmra.mxu0 %v496
        %v597 = vpop.f32.mrf.mxu0
        %v598 = vadd.f32 0.0, %v597
        %v599 = vpop.f32.mrf.mxu0
        %v600 = vadd.f32 0.0, %v599
        %601 = vmatmul.bf16.gmra.mxu0 %v497
        %v602 = vpop.f32.mrf.mxu0
        %v603 = vadd.f32 0.0, %v602
        %v604 = vpop.f32.mrf.mxu0
        %v605 = vadd.f32 0.0, %v604
        %606 = vmatmul.bf16.gmra.mxu0 %v498
        %v607 = vpop.f32.mrf.mxu0
        %v608 = vadd.f32 0.0, %v607
        %v609 = vpop.f32.mrf.mxu0
        %v610 = vadd.f32 0.0, %v609
        %611 = vmatmul.bf16.gmra.mxu0 %v499
        %v612 = vpop.f32.mrf.mxu0
        %v613 = vadd.f32 0.0, %v612
        %v614 = vpop.f32.mrf.mxu0
        %v615 = vadd.f32 0.0, %v614
        %616 = vmatmul.bf16.gmra.mxu0 %v500
        %v617 = vpop.f32.mrf.mxu0
        %v618 = vadd.f32 0.0, %v617
        %v619 = vpop.f32.mrf.mxu0
        %v620 = vadd.f32 0.0, %v619
        %621 = vmatmul.bf16.gmra.mxu0 %v501
        %v622 = vpop.f32.mrf.mxu0
        %v623 = vadd.f32 0.0, %v622
        %v624 = vpop.f32.mrf.mxu0
        %v625 = vadd.f32 0.0, %v624
        %626 = vmatmul.bf16.gmra.mxu0 %v502
        %v627 = vpop.f32.mrf.mxu0
        %v628 = vadd.f32 0.0, %v627
        %v629 = vpop.f32.mrf.mxu0
        %v630 = vadd.f32 0.0, %v629
        %631 = vmatmul.bf16.gmra.mxu0 %v503
        %v632 = vpop.f32.mrf.mxu0
        %v633 = vadd.f32 0.0, %v632
        %v634 = vpop.f32.mrf.mxu0
        %v635 = vadd.f32 0.0, %v634
        %636 = vmatmul.bf16.gmra.mxu0 %v504
        %v637 = vpop.f32.mrf.mxu0
        %v638 = vadd.f32 0.0, %v637
        %v639 = vpop.f32.mrf.mxu0
        %v640 = vadd.f32 0.0, %v639
        %641 = vmatmul.bf16.gmra.mxu0 %v505
        %v642 = vpop.f32.mrf.mxu0
        %v643 = vadd.f32 0.0, %v642
        %v644 = vpop.f32.mrf.mxu0
        %v645 = vadd.f32 0.0, %v644
        %646 = vmatmul.bf16.gmra.mxu0 %v506
        %v647 = vpop.f32.mrf.mxu0
        %v648 = vadd.f32 0.0, %v647
        %v649 = vpop.f32.mrf.mxu0
        %v650 = vadd.f32 0.0, %v649
        %651 = vmatmul.bf16.gmra.mxu0 %v507
        %v652 = vpop.f32.mrf.mxu0
        %v653 = vadd.f32 0.0, %v652
        %v654 = vpop.f32.mrf.mxu0
        %v655 = vadd.f32 0.0, %v654
        %656 = vmatmul.bf16.gmra.mxu0 %v508
        %v657 = vpop.f32.mrf.mxu0
        %v658 = vadd.f32 0.0, %v657
        %v659 = vpop.f32.mrf.mxu0
        %v660 = vadd.f32 0.0, %v659
        %661 = vmatmul.bf16.gmra.mxu0 %v509
        %v662 = vpop.f32.mrf.mxu0
        %v663 = vadd.f32 0.0, %v662
        %v664 = vpop.f32.mrf.mxu0
        %v665 = vadd.f32 0.0, %v664
        %666 = vmatmul.bf16.gmra.mxu0 %v510
        %v667 = vpop.f32.mrf.mxu0
        %v668 = vadd.f32 0.0, %v667
        %v669 = vpop.f32.mrf.mxu0
        %v670 = vadd.f32 0.0, %v669
        %671 = vmatmul.bf16.gmra.mxu0 %v511
        %v672 = vpop.f32.mrf.mxu0
        %v673 = vadd.f32 0.0, %v672
        %v674 = vpop.f32.mrf.mxu0
        %v675 = vadd.f32 0.0, %v674
        %676 = vmatmul.bf16.gmra.mxu0 %v512
        %v677 = vpop.f32.mrf.mxu0
        %v678 = vadd.f32 0.0, %v677
        %v679 = vpop.f32.mrf.mxu0
        %v680 = vadd.f32 0.0, %v679
        %681 = vmatmul.bf16.gmra.mxu0 %v513
        %v682 = vpop.f32.mrf.mxu0
        %v683 = vadd.f32 0.0, %v682
        %v684 = vpop.f32.mrf.mxu0
        %v685 = vadd.f32 0.0, %v684
        %686 = vmatmul.bf16.gmra.mxu0 %v514
        %v687 = vpop.f32.mrf.mxu0
        %v688 = vadd.f32 0.0, %v687
        %v689 = vpop.f32.mrf.mxu0
        %v690 = vadd.f32 0.0, %v689
        %691 = vmatmul.bf16.gmra.mxu0 %v515
        %v692 = vpop.f32.mrf.mxu0
        %v693 = vadd.f32 0.0, %v692
        %v694 = vpop.f32.mrf.mxu0
        %v695 = vadd.f32 0.0, %v694
        %696 = vmatmul.bf16.gmra.mxu0 %v516
        %v697 = vpop.f32.mrf.mxu0
        %v698 = vadd.f32 0.0, %v697
        %v699 = vpop.f32.mrf.mxu0
        %v700 = vadd.f32 0.0, %v699
        %701 = vmatmul.bf16.gmra.mxu0 %v517
        %v702 = vpop.f32.mrf.mxu0
        %v703 = vadd.f32 0.0, %v702
        %v704 = vpop.f32.mrf.mxu0
        %v705 = vadd.f32 0.0, %v704
        %706 = vmatmul.bf16.gmra.mxu0 %v518
        %v707 = vpop.f32.mrf.mxu0
        %v708 = vadd.f32 0.0, %v707
        %v709 = vpop.f32.mrf.mxu0
        %v710 = vadd.f32 0.0, %v709
        %711 = vmatmul.bf16.gmra.mxu0 %v519
        %v712 = vpop.f32.mrf.mxu0
        %v713 = vadd.f32 0.0, %v712
        %v714 = vpop.f32.mrf.mxu0
        %v715 = vadd.f32 0.0, %v714
        %716 = vmatmul.bf16.gmra.mxu0 %v520
        %v717 = vpop.f32.mrf.mxu0
        %v718 = vadd.f32 0.0, %v717
        %v719 = vpop.f32.mrf.mxu0
        %v720 = vadd.f32 0.0, %v719
        %721 = vdwg.mxu0
        %v722 = vld [vmem:[#allocation2] sm:$0xf]
        %v723 = vld [vmem:[#allocation2 + $0x4] sm:$0xf]
        %v724 = vld [vmem:[#allocation2 + $0x8] sm:$0xf]
        %v725 = vld [vmem:[#allocation2 + $0xc] sm:$0xf]
        %v726 = vpack.c.bf16 %v565, %v563
        %v727 = vpack.c.bf16 %v570, %v568
        %v728 = vpack.c.bf16 %v575, %v573
        %v729 = vpack.c.bf16 %v580, %v578
        %v730 = vpack.c.bf16 %v585, %v583
        %v731 = vpack.c.bf16 %v590, %v588
        %v732 = vpack.c.bf16 %v595, %v593
        %v733 = vpack.c.bf16 %v600, %v598
        %s734 = scalar_lea.vmem [#allocation2], 16
        %v735 = vld [vmem:[%s734] sm:$0xf]
        %v736 = vld [vmem:[%s734 + $0x4] sm:$0xf]
        %v737 = vld [vmem:[%s734 + $0x8] sm:$0xf]
        %v738 = vld [vmem:[%s734 + $0xc] sm:$0xf]
        %v743 = vunpack.c.l.b16 %v735
        %v744 = vunpack.c.l.b16 %v736
        %v745 = vunpack.c.l.b16 %v737
        %v746 = vunpack.c.l.b16 %v738
        %v747 = vpack.c.b16 %v744, %v743
        %v748 = vpack.c.b16 %v746, %v745
        %vm751 = vcmask 261120
        %v753 = vsel %vm751, %v726, 0
        %v756 = vsel %vm751, %v727, 0
        %v759 = vsel %vm751, %v728, 0
        %v762 = vsel %vm751, %v729, 0
        %v765 = vsel %vm751, %v730, 0
        %v768 = vsel %vm751, %v731, 0
        %v771 = vsel %vm751, %v732, 0
        %v774 = vsel %vm751, %v733, 0
        %776 = vmatpush.bf16.msra.mxu0 0
        %777 = vmatpush.bf16.msra.mxu0 0
        %778 = vmatpush.bf16.msra.mxu0 0
        %779 = vmatpush.bf16.msra.mxu0 0
        %780 = vmatpush.bf16.msra.mxu0 0
        %781 = vmatpush.bf16.msra.mxu0 0
        %782 = vmatpush.bf16.msra.mxu0 %v748
        %783 = vmatpush.bf16.msra.mxu0 %v747
        %784 = vmatmul.bf16.gmra.mxu0 %v753
        %v785 = vpop.f32.mrf.mxu0
        %v786 = vadd.f32 0.0, %v785
        %v787 = vpop.f32.mrf.mxu0
        %v788 = vadd.f32 0.0, %v787
        %789 = vmatmul.bf16.gmra.mxu0 %v756
        %v790 = vpop.f32.mrf.mxu0
        %v791 = vadd.f32 0.0, %v790
        %v792 = vpop.f32.mrf.mxu0
        %v793 = vadd.f32 0.0, %v792
        %794 = vmatmul.bf16.gmra.mxu0 %v759
        %v795 = vpop.f32.mrf.mxu0
        %v796 = vadd.f32 0.0, %v795
        %v797 = vpop.f32.mrf.mxu0
        %v798 = vadd.f32 0.0, %v797
        %799 = vmatmul.bf16.gmra.mxu0 %v762
        %v800 = vpop.f32.mrf.mxu0
        %v801 = vadd.f32 0.0, %v800
        %v802 = vpop.f32.mrf.mxu0
        %v803 = vadd.f32 0.0, %v802
        %804 = vmatmul.bf16.gmra.mxu0 %v765
        %v805 = vpop.f32.mrf.mxu0
        %v806 = vadd.f32 0.0, %v805
        %v807 = vpop.f32.mrf.mxu0
        %v808 = vadd.f32 0.0, %v807
        %809 = vmatmul.bf16.gmra.mxu0 %v768
        %v810 = vpop.f32.mrf.mxu0
        %v811 = vadd.f32 0.0, %v810
        %v812 = vpop.f32.mrf.mxu0
        %v813 = vadd.f32 0.0, %v812
        %814 = vmatmul.bf16.gmra.mxu0 %v771
        %v815 = vpop.f32.mrf.mxu0
        %v816 = vadd.f32 0.0, %v815
        %v817 = vpop.f32.mrf.mxu0
        %v818 = vadd.f32 0.0, %v817
        %819 = vmatmul.bf16.gmra.mxu0 %v774
        %v820 = vpop.f32.mrf.mxu0
        %v821 = vadd.f32 0.0, %v820
        %v822 = vpop.f32.mrf.mxu0
        %v823 = vadd.f32 0.0, %v822
        %824 = vdwg.mxu0
        %v829 = vunpack.c.l.b16 %v722
        %v830 = vunpack.c.l.b16 %v723
        %v831 = vunpack.c.l.b16 %v724
        %v832 = vunpack.c.l.b16 %v725
        %v833 = vpack.c.b16 %v830, %v829
        %v834 = vpack.c.b16 %v832, %v831
        %v838 = vsel %vm751, %v353, 0
        %v841 = vsel %vm751, %v354, 0
        %v844 = vsel %vm751, %v355, 0
        %v847 = vsel %vm751, %v356, 0
        %v850 = vsel %vm751, %v357, 0
        %v853 = vsel %vm751, %v358, 0
        %v856 = vsel %vm751, %v359, 0
        %v859 = vsel %vm751, %v360, 0
        %861 = vmatpush.bf16.msra.mxu0 0
        %862 = vmatpush.bf16.msra.mxu0 0
        %863 = vmatpush.bf16.msra.mxu0 0
        %864 = vmatpush.bf16.msra.mxu0 0
        %865 = vmatpush.bf16.msra.mxu0 0
        %866 = vmatpush.bf16.msra.mxu0 0
        %867 = vmatpush.bf16.msra.mxu0 %v834
        %868 = vmatpush.bf16.msra.mxu0 %v833
        %869 = vmatmul.bf16.gmra.mxu0 %v838
        %v870 = vpop.f32.mrf.mxu0
        %v871 = vadd.f32 %v786, %v870
        %v872 = vpop.f32.mrf.mxu0
        %v873 = vadd.f32 %v788, %v872
        %874 = vmatmul.bf16.gmra.mxu0 %v841
        %v875 = vpop.f32.mrf.mxu0
        %v876 = vadd.f32 %v791, %v875
        %v877 = vpop.f32.mrf.mxu0
        %v878 = vadd.f32 %v793, %v877
        %879 = vmatmul.bf16.gmra.mxu0 %v844
        %v880 = vpop.f32.mrf.mxu0
        %v881 = vadd.f32 %v796, %v880
        %v882 = vpop.f32.mrf.mxu0
        %v883 = vadd.f32 %v798, %v882
        %884 = vmatmul.bf16.gmra.mxu0 %v847
        %v885 = vpop.f32.mrf.mxu0
        %v886 = vadd.f32 %v801, %v885
        %v887 = vpop.f32.mrf.mxu0
        %v888 = vadd.f32 %v803, %v887
        %889 = vmatmul.bf16.gmra.mxu0 %v850
        %v890 = vpop.f32.mrf.mxu0
        %v891 = vadd.f32 %v806, %v890
        %v892 = vpop.f32.mrf.mxu0
        %v893 = vadd.f32 %v808, %v892
        %894 = vmatmul.bf16.gmra.mxu0 %v853
        %v895 = vpop.f32.mrf.mxu0
        %v896 = vadd.f32 %v811, %v895
        %v897 = vpop.f32.mrf.mxu0
        %v898 = vadd.f32 %v813, %v897
        %899 = vmatmul.bf16.gmra.mxu0 %v856
        %v900 = vpop.f32.mrf.mxu0
        %v901 = vadd.f32 %v816, %v900
        %v902 = vpop.f32.mrf.mxu0
        %v903 = vadd.f32 %v818, %v902
        %904 = vmatmul.bf16.gmra.mxu0 %v859
        %v905 = vpop.f32.mrf.mxu0
        %v906 = vadd.f32 %v821, %v905
        %v907 = vpop.f32.mrf.mxu0
        %v908 = vadd.f32 %v823, %v907
        %909 = vdwg.mxu0
        %v910 = vpack.c.bf16 %v605, %v603
        %v911 = vpack.c.bf16 %v610, %v608
        %v912 = vpack.c.bf16 %v615, %v613
        %v913 = vpack.c.bf16 %v620, %v618
        %v914 = vpack.c.bf16 %v625, %v623
        %v915 = vpack.c.bf16 %v630, %v628
        %v916 = vpack.c.bf16 %v635, %v633
        %v917 = vpack.c.bf16 %v640, %v638
        %s918 = scalar_lea.vmem [#allocation2], 32
        %v919 = vld [vmem:[%s918] sm:$0xf]
        %v920 = vld [vmem:[%s918 + $0x4] sm:$0xf]
        %v921 = vld [vmem:[%s918 + $0x8] sm:$0xf]
        %v922 = vld [vmem:[%s918 + $0xc] sm:$0xf]
        %v927 = vunpack.c.l.b16 %v919
        %v928 = vunpack.c.l.b16 %v920
        %v929 = vunpack.c.l.b16 %v921
        %v930 = vunpack.c.l.b16 %v922
        %v931 = vpack.c.b16 %v928, %v927
        %v932 = vpack.c.b16 %v930, %v929
        %v936 = vsel %vm751, %v910, 0
        %v939 = vsel %vm751, %v911, 0
        %v942 = vsel %vm751, %v912, 0
        %v945 = vsel %vm751, %v913, 0
        %v948 = vsel %vm751, %v914, 0
        %v951 = vsel %vm751, %v915, 0
        %v954 = vsel %vm751, %v916, 0
        %v957 = vsel %vm751, %v917, 0
        %959 = vmatpush.bf16.msra.mxu0 0
        %960 = vmatpush.bf16.msra.mxu0 0
        %961 = vmatpush.bf16.msra.mxu0 0
        %962 = vmatpush.bf16.msra.mxu0 0
        %963 = vmatpush.bf16.msra.mxu0 0
        %964 = vmatpush.bf16.msra.mxu0 0
        %965 = vmatpush.bf16.msra.mxu0 %v932
        %966 = vmatpush.bf16.msra.mxu0 %v931
        %967 = vmatmul.bf16.gmra.mxu0 %v936
        %v968 = vpop.f32.mrf.mxu0
        %v969 = vadd.f32 0.0, %v968
        %v970 = vpop.f32.mrf.mxu0
        %v971 = vadd.f32 0.0, %v970
        %972 = vmatmul.bf16.gmra.mxu0 %v939
        %v973 = vpop.f32.mrf.mxu0
        %v974 = vadd.f32 0.0, %v973
        %v975 = vpop.f32.mrf.mxu0
        %v976 = vadd.f32 0.0, %v975
        %977 = vmatmul.bf16.gmra.mxu0 %v942
        %v978 = vpop.f32.mrf.mxu0
        %v979 = vadd.f32 0.0, %v978
        %v980 = vpop.f32.mrf.mxu0
        %v981 = vadd.f32 0.0, %v980
        %982 = vmatmul.bf16.gmra.mxu0 %v945
        %v983 = vpop.f32.mrf.mxu0
        %v984 = vadd.f32 0.0, %v983
        %v985 = vpop.f32.mrf.mxu0
        %v986 = vadd.f32 0.0, %v985
        %987 = vmatmul.bf16.gmra.mxu0 %v948
        %v988 = vpop.f32.mrf.mxu0
        %v989 = vadd.f32 0.0, %v988
        %v990 = vpop.f32.mrf.mxu0
        %v991 = vadd.f32 0.0, %v990
        %992 = vmatmul.bf16.gmra.mxu0 %v951
        %v993 = vpop.f32.mrf.mxu0
        %v994 = vadd.f32 0.0, %v993
        %v995 = vpop.f32.mrf.mxu0
        %v996 = vadd.f32 0.0, %v995
        %997 = vmatmul.bf16.gmra.mxu0 %v954
        %v998 = vpop.f32.mrf.mxu0
        %v999 = vadd.f32 0.0, %v998
        %v1000 = vpop.f32.mrf.mxu0
        %v1001 = vadd.f32 0.0, %v1000
        %1002 = vmatmul.bf16.gmra.mxu0 %v957
        %v1003 = vpop.f32.mrf.mxu0
        %v1004 = vadd.f32 0.0, %v1003
        %v1005 = vpop.f32.mrf.mxu0
        %v1006 = vadd.f32 0.0, %v1005
        %1007 = vdwg.mxu0
        %v1008 = vadd.f32 %v871, %v969
        %v1009 = vadd.f32 %v873, %v971
        %v1010 = vadd.f32 %v876, %v974
        %v1011 = vadd.f32 %v878, %v976
        %v1012 = vadd.f32 %v881, %v979
        %v1013 = vadd.f32 %v883, %v981
        %v1014 = vadd.f32 %v886, %v984
        %v1015 = vadd.f32 %v888, %v986
        %v1016 = vadd.f32 %v891, %v989
        %v1017 = vadd.f32 %v893, %v991
        %v1018 = vadd.f32 %v896, %v994
        %v1019 = vadd.f32 %v898, %v996
        %v1020 = vadd.f32 %v901, %v999
        %v1021 = vadd.f32 %v903, %v1001
        %v1022 = vadd.f32 %v906, %v1004
        %v1023 = vadd.f32 %v908, %v1006
        %v1024 = vpack.c.bf16 %v645, %v643
        %v1025 = vpack.c.bf16 %v650, %v648
        %v1026 = vpack.c.bf16 %v655, %v653
        %v1027 = vpack.c.bf16 %v660, %v658
        %v1028 = vpack.c.bf16 %v665, %v663
        %v1029 = vpack.c.bf16 %v670, %v668
        %v1030 = vpack.c.bf16 %v675, %v673
        %v1031 = vpack.c.bf16 %v680, %v678
        %s1032 = scalar_lea.vmem [#allocation2], 48
        %v1033 = vld [vmem:[%s1032] sm:$0xf]
        %v1034 = vld [vmem:[%s1032 + $0x4] sm:$0xf]
        %v1035 = vld [vmem:[%s1032 + $0x8] sm:$0xf]
        %v1036 = vld [vmem:[%s1032 + $0xc] sm:$0xf]
        %v1041 = vunpack.c.l.b16 %v1033
        %v1042 = vunpack.c.l.b16 %v1034
        %v1043 = vunpack.c.l.b16 %v1035
        %v1044 = vunpack.c.l.b16 %v1036
        %v1045 = vpack.c.b16 %v1042, %v1041
        %v1046 = vpack.c.b16 %v1044, %v1043
        %v1050 = vsel %vm751, %v1024, 0
        %v1053 = vsel %vm751, %v1025, 0
        %v1056 = vsel %vm751, %v1026, 0
        %v1059 = vsel %vm751, %v1027, 0
        %v1062 = vsel %vm751, %v1028, 0
        %v1065 = vsel %vm751, %v1029, 0
        %v1068 = vsel %vm751, %v1030, 0
        %v1071 = vsel %vm751, %v1031, 0
        %1073 = vmatpush.bf16.msra.mxu0 0
        %1074 = vmatpush.bf16.msra.mxu0 0
        %1075 = vmatpush.bf16.msra.mxu0 0
        %1076 = vmatpush.bf16.msra.mxu0 0
        %1077 = vmatpush.bf16.msra.mxu0 0
        %1078 = vmatpush.bf16.msra.mxu0 0
        %1079 = vmatpush.bf16.msra.mxu0 %v1046
        %1080 = vmatpush.bf16.msra.mxu0 %v1045
        %1081 = vmatmul.bf16.gmra.mxu0 %v1050
        %v1082 = vpop.f32.mrf.mxu0
        %v1083 = vadd.f32 0.0, %v1082
        %v1084 = vpop.f32.mrf.mxu0
        %v1085 = vadd.f32 0.0, %v1084
        %1086 = vmatmul.bf16.gmra.mxu0 %v1053
        %v1087 = vpop.f32.mrf.mxu0
        %v1088 = vadd.f32 0.0, %v1087
        %v1089 = vpop.f32.mrf.mxu0
        %v1090 = vadd.f32 0.0, %v1089
        %1091 = vmatmul.bf16.gmra.mxu0 %v1056
        %v1092 = vpop.f32.mrf.mxu0
        %v1093 = vadd.f32 0.0, %v1092
        %v1094 = vpop.f32.mrf.mxu0
        %v1095 = vadd.f32 0.0, %v1094
        %1096 = vmatmul.bf16.gmra.mxu0 %v1059
        %v1097 = vpop.f32.mrf.mxu0
        %v1098 = vadd.f32 0.0, %v1097
        %v1099 = vpop.f32.mrf.mxu0
        %v1100 = vadd.f32 0.0, %v1099
        %1101 = vmatmul.bf16.gmra.mxu0 %v1062
        %v1102 = vpop.f32.mrf.mxu0
        %v1103 = vadd.f32 0.0, %v1102
        %v1104 = vpop.f32.mrf.mxu0
        %v1105 = vadd.f32 0.0, %v1104
        %1106 = vmatmul.bf16.gmra.mxu0 %v1065
        %v1107 = vpop.f32.mrf.mxu0
        %v1108 = vadd.f32 0.0, %v1107
        %v1109 = vpop.f32.mrf.mxu0
        %v1110 = vadd.f32 0.0, %v1109
        %1111 = vmatmul.bf16.gmra.mxu0 %v1068
        %v1112 = vpop.f32.mrf.mxu0
        %v1113 = vadd.f32 0.0, %v1112
        %v1114 = vpop.f32.mrf.mxu0
        %v1115 = vadd.f32 0.0, %v1114
        %1116 = vmatmul.bf16.gmra.mxu0 %v1071
        %v1117 = vpop.f32.mrf.mxu0
        %v1118 = vadd.f32 0.0, %v1117
        %v1119 = vpop.f32.mrf.mxu0
        %v1120 = vadd.f32 0.0, %v1119
        %1121 = vdwg.mxu0
        %v1122 = vadd.f32 %v1008, %v1083
        %v1123 = vadd.f32 %v1009, %v1085
        %v1124 = vadd.f32 %v1010, %v1088
        %v1125 = vadd.f32 %v1011, %v1090
        %v1126 = vadd.f32 %v1012, %v1093
        %v1127 = vadd.f32 %v1013, %v1095
        %v1128 = vadd.f32 %v1014, %v1098
        %v1129 = vadd.f32 %v1015, %v1100
        %v1130 = vadd.f32 %v1016, %v1103
        %v1131 = vadd.f32 %v1017, %v1105
        %v1132 = vadd.f32 %v1018, %v1108
        %v1133 = vadd.f32 %v1019, %v1110
        %v1134 = vadd.f32 %v1020, %v1113
        %v1135 = vadd.f32 %v1021, %v1115
        %v1136 = vadd.f32 %v1022, %v1118
        %v1137 = vadd.f32 %v1023, %v1120
        %v1138 = vpack.c.bf16 %v685, %v683
        %v1139 = vpack.c.bf16 %v690, %v688
        %v1140 = vpack.c.bf16 %v695, %v693
        %v1141 = vpack.c.bf16 %v700, %v698
        %v1142 = vpack.c.bf16 %v705, %v703
        %v1143 = vpack.c.bf16 %v710, %v708
        %v1144 = vpack.c.bf16 %v715, %v713
        %v1145 = vpack.c.bf16 %v720, %v718
        %s1146 = scalar_lea.vmem [#allocation2], 64
        %v1147 = vld [vmem:[%s1146] sm:$0xf]
        %v1148 = vld [vmem:[%s1146 + $0x4] sm:$0xf]
        %v1149 = vld [vmem:[%s1146 + $0x8] sm:$0xf]
        %v1150 = vld [vmem:[%s1146 + $0xc] sm:$0xf]
        %v1155 = vunpack.c.l.b16 %v1147
        %v1156 = vunpack.c.l.b16 %v1148
        %v1157 = vunpack.c.l.b16 %v1149
        %v1158 = vunpack.c.l.b16 %v1150
        %v1159 = vpack.c.b16 %v1156, %v1155
        %v1160 = vpack.c.b16 %v1158, %v1157
        %v1164 = vsel %vm751, %v1138, 0
        %v1167 = vsel %vm751, %v1139, 0
        %v1170 = vsel %vm751, %v1140, 0
        %v1173 = vsel %vm751, %v1141, 0
        %v1176 = vsel %vm751, %v1142, 0
        %v1179 = vsel %vm751, %v1143, 0
        %v1182 = vsel %vm751, %v1144, 0
        %v1185 = vsel %vm751, %v1145, 0
        %1187 = vmatpush.bf16.msra.mxu0 0
        %1188 = vmatpush.bf16.msra.mxu0 0
        %1189 = vmatpush.bf16.msra.mxu0 0
        %1190 = vmatpush.bf16.msra.mxu0 0
        %1191 = vmatpush.bf16.msra.mxu0 0
        %1192 = vmatpush.bf16.msra.mxu0 0
        %1193 = vmatpush.bf16.msra.mxu0 %v1160
        %1194 = vmatpush.bf16.msra.mxu0 %v1159
        %1195 = vmatmul.bf16.gmra.mxu0 %v1164
        %v1196 = vpop.f32.mrf.mxu0
        %v1197 = vadd.f32 0.0, %v1196
        %v1198 = vpop.f32.mrf.mxu0
        %v1199 = vadd.f32 0.0, %v1198
        %1200 = vmatmul.bf16.gmra.mxu0 %v1167
        %v1201 = vpop.f32.mrf.mxu0
        %v1202 = vadd.f32 0.0, %v1201
        %v1203 = vpop.f32.mrf.mxu0
        %v1204 = vadd.f32 0.0, %v1203
        %1205 = vmatmul.bf16.gmra.mxu0 %v1170
        %v1206 = vpop.f32.mrf.mxu0
        %v1207 = vadd.f32 0.0, %v1206
        %v1208 = vpop.f32.mrf.mxu0
        %v1209 = vadd.f32 0.0, %v1208
        %1210 = vmatmul.bf16.gmra.mxu0 %v1173
        %v1211 = vpop.f32.mrf.mxu0
        %v1212 = vadd.f32 0.0, %v1211
        %v1213 = vpop.f32.mrf.mxu0
        %v1214 = vadd.f32 0.0, %v1213
        %1215 = vmatmul.bf16.gmra.mxu0 %v1176
        %v1216 = vpop.f32.mrf.mxu0
        %v1217 = vadd.f32 0.0, %v1216
        %v1218 = vpop.f32.mrf.mxu0
        %v1219 = vadd.f32 0.0, %v1218
        %1220 = vmatmul.bf16.gmra.mxu0 %v1179
        %v1221 = vpop.f32.mrf.mxu0
        %v1222 = vadd.f32 0.0, %v1221
        %v1223 = vpop.f32.mrf.mxu0
        %v1224 = vadd.f32 0.0, %v1223
        %1225 = vmatmul.bf16.gmra.mxu0 %v1182
        %v1226 = vpop.f32.mrf.mxu0
        %v1227 = vadd.f32 0.0, %v1226
        %v1228 = vpop.f32.mrf.mxu0
        %v1229 = vadd.f32 0.0, %v1228
        %1230 = vmatmul.bf16.gmra.mxu0 %v1185
        %v1231 = vpop.f32.mrf.mxu0
        %v1232 = vadd.f32 0.0, %v1231
        %v1233 = vpop.f32.mrf.mxu0
        %v1234 = vadd.f32 0.0, %v1233
        %1235 = vdwg.mxu0
        %v1236 = vadd.f32 %v1122, %v1197
        %v1237 = vadd.f32 %v1123, %v1199
        %v1238 = vadd.f32 %v1124, %v1202
        %v1239 = vadd.f32 %v1125, %v1204
        %v1240 = vadd.f32 %v1126, %v1207
        %v1241 = vadd.f32 %v1127, %v1209
        %v1242 = vadd.f32 %v1128, %v1212
        %v1243 = vadd.f32 %v1129, %v1214
        %v1244 = vadd.f32 %v1130, %v1217
        %v1245 = vadd.f32 %v1131, %v1219
        %v1246 = vadd.f32 %v1132, %v1222
        %v1247 = vadd.f32 %v1133, %v1224
        %v1248 = vadd.f32 %v1134, %v1227
        %v1249 = vadd.f32 %v1135, %v1229
        %v1250 = vadd.f32 %v1136, %v1232
        %v1251 = vadd.f32 %v1137, %v1234
        %v1253 = vperm.slane %v334, 0
        %v1255 = vadd.f32 %v1236, %v1253
        %v1256 = vadd.f32 %v1237, %v1253
        %v1257 = vadd.f32 %v1238, %v1253
        %v1258 = vadd.f32 %v1239, %v1253
        %v1259 = vadd.f32 %v1240, %v1253
        %v1260 = vadd.f32 %v1241, %v1253
        %v1261 = vadd.f32 %v1242, %v1253
        %v1262 = vadd.f32 %v1243, %v1253
        %v1263 = vadd.f32 %v1244, %v1253
        %v1264 = vadd.f32 %v1245, %v1253
        %v1265 = vadd.f32 %v1246, %v1253
        %v1266 = vadd.f32 %v1247, %v1253
        %v1267 = vadd.f32 %v1248, %v1253
        %v1268 = vadd.f32 %v1249, %v1253
        %v1269 = vadd.f32 %v1250, %v1253
        %v1270 = vadd.f32 %v1251, %v1253
        %v1271 = vadd.f32 %v1255, %v337
        %v1272 = vadd.f32 %v1256, %v338
        %v1273 = vadd.f32 %v1257, %v339
        %v1274 = vadd.f32 %v1258, %v340
        %v1275 = vadd.f32 %v1259, %v341
        %v1276 = vadd.f32 %v1260, %v342
        %v1277 = vadd.f32 %v1261, %v343
        %v1278 = vadd.f32 %v1262, %v344
        %v1279 = vadd.f32 %v1263, %v345
        %v1280 = vadd.f32 %v1264, %v346
        %v1281 = vadd.f32 %v1265, %v347
        %v1282 = vadd.f32 %v1266, %v348
        %v1283 = vadd.f32 %v1267, %v349
        %v1284 = vadd.f32 %v1268, %v350
        %v1285 = vadd.f32 %v1269, %v351
        %v1286 = vadd.f32 %v1270, %v352
        %v1287 = vsel %vm751, %v1271, 0.0
        %1288 = vadd.xlane.f32.xlu0 %v1287
        %v1289 = vpop.xlane.xlu0 %1288
        %v1290 = vsel %vm751, %v1272, 0.0
        %1291 = vadd.xlane.f32.xlu0 %v1290
        %v1292 = vpop.xlane.xlu0 %1291
        %v1293 = vsel %vm751, %v1273, 0.0
        %1294 = vadd.xlane.f32.xlu0 %v1293
        %v1295 = vpop.xlane.xlu0 %1294
        %v1296 = vsel %vm751, %v1274, 0.0
        %1297 = vadd.xlane.f32.xlu0 %v1296
        %v1298 = vpop.xlane.xlu0 %1297
        %v1299 = vsel %vm751, %v1275, 0.0
        %1300 = vadd.xlane.f32.xlu0 %v1299
        %v1301 = vpop.xlane.xlu0 %1300
        %v1302 = vsel %vm751, %v1276, 0.0
        %1303 = vadd.xlane.f32.xlu0 %v1302
        %v1304 = vpop.xlane.xlu0 %1303
        %v1305 = vsel %vm751, %v1277, 0.0
        %1306 = vadd.xlane.f32.xlu0 %v1305
        %v1307 = vpop.xlane.xlu0 %1306
        %v1308 = vsel %vm751, %v1278, 0.0
        %1309 = vadd.xlane.f32.xlu0 %v1308
        %v1310 = vpop.xlane.xlu0 %1309
        %v1311 = vsel %vm751, %v1279, 0.0
        %1312 = vadd.xlane.f32.xlu0 %v1311
        %v1313 = vpop.xlane.xlu0 %1312
        %v1314 = vsel %vm751, %v1280, 0.0
        %1315 = vadd.xlane.f32.xlu0 %v1314
        %v1316 = vpop.xlane.xlu0 %1315
        %v1317 = vsel %vm751, %v1281, 0.0
        %1318 = vadd.xlane.f32.xlu0 %v1317
        %v1319 = vpop.xlane.xlu0 %1318
        %v1320 = vsel %vm751, %v1282, 0.0
        %1321 = vadd.xlane.f32.xlu0 %v1320
        %v1322 = vpop.xlane.xlu0 %1321
        %v1323 = vsel %vm751, %v1283, 0.0
        %1324 = vadd.xlane.f32.xlu0 %v1323
        %v1325 = vpop.xlane.xlu0 %1324
        %v1326 = vsel %vm751, %v1284, 0.0
        %1327 = vadd.xlane.f32.xlu0 %v1326
        %v1328 = vpop.xlane.xlu0 %1327
        %v1329 = vsel %vm751, %v1285, 0.0
        %1330 = vadd.xlane.f32.xlu0 %v1329
        %v1331 = vpop.xlane.xlu0 %1330
        %v1332 = vsel %vm751, %v1286, 0.0
        %1333 = vadd.xlane.f32.xlu0 %v1332
        %v1334 = vpop.xlane.xlu0 %1333
        %v1335 = vrcp.pop 32.0
        %v1336 = vmul.f32 32.0, %v1335
        %v1337 = vsub.f32 1.0, %v1336
        %v1338 = vmul.f32 %v1335, %v1337
        %v1339 = vadd.f32 %v1335, %v1338
        %vm1340 = vweird.f32 %v1335
        %v1341 = vsel %vm1340, %v1335, %v1339
        %v1342 = vmul.f32 %v1289, %v1341
        %v1343 = vmul.f32 %v1292, %v1341
        %v1344 = vmul.f32 %v1295, %v1341
        %v1345 = vmul.f32 %v1298, %v1341
        %v1346 = vmul.f32 %v1301, %v1341
        %v1347 = vmul.f32 %v1304, %v1341
        %v1348 = vmul.f32 %v1307, %v1341
        %v1349 = vmul.f32 %v1310, %v1341
        %v1350 = vmul.f32 %v1313, %v1341
        %v1351 = vmul.f32 %v1316, %v1341
        %v1352 = vmul.f32 %v1319, %v1341
        %v1353 = vmul.f32 %v1322, %v1341
        %v1354 = vmul.f32 %v1325, %v1341
        %v1355 = vmul.f32 %v1328, %v1341
        %v1356 = vmul.f32 %v1331, %v1341
        %v1357 = vmul.f32 %v1334, %v1341
        %v1358 = vsub.f32 %v1271, %v1342
        %v1359 = vsub.f32 %v1272, %v1343
        %v1360 = vsub.f32 %v1273, %v1344
        %v1361 = vsub.f32 %v1274, %v1345
        %v1362 = vsub.f32 %v1275, %v1346
        %v1363 = vsub.f32 %v1276, %v1347
        %v1364 = vsub.f32 %v1277, %v1348
        %v1365 = vsub.f32 %v1278, %v1349
        %v1366 = vsub.f32 %v1279, %v1350
        %v1367 = vsub.f32 %v1280, %v1351
        %v1368 = vsub.f32 %v1281, %v1352
        %v1369 = vsub.f32 %v1282, %v1353
        %v1370 = vsub.f32 %v1283, %v1354
        %v1371 = vsub.f32 %v1284, %v1355
        %v1372 = vsub.f32 %v1285, %v1356
        %v1373 = vsub.f32 %v1286, %v1357
        %v1374 = vmul.f32 %v1358, %v1358
        %v1375 = vmul.f32 %v1359, %v1359
        %v1376 = vmul.f32 %v1360, %v1360
        %v1377 = vmul.f32 %v1361, %v1361
        %v1378 = vmul.f32 %v1362, %v1362
        %v1379 = vmul.f32 %v1363, %v1363
        %v1380 = vmul.f32 %v1364, %v1364
        %v1381 = vmul.f32 %v1365, %v1365
        %v1382 = vmul.f32 %v1366, %v1366
        %v1383 = vmul.f32 %v1367, %v1367
        %v1384 = vmul.f32 %v1368, %v1368
        %v1385 = vmul.f32 %v1369, %v1369
        %v1386 = vmul.f32 %v1370, %v1370
        %v1387 = vmul.f32 %v1371, %v1371
        %v1388 = vmul.f32 %v1372, %v1372
        %v1389 = vmul.f32 %v1373, %v1373
        %v1390 = vsel %vm751, %v1374, 0.0
        %1391 = vadd.xlane.f32.xlu0 %v1390
        %v1392 = vpop.xlane.xlu0 %1391
        %v1393 = vsel %vm751, %v1375, 0.0
        %1394 = vadd.xlane.f32.xlu0 %v1393
        %v1395 = vpop.xlane.xlu0 %1394
        %v1396 = vsel %vm751, %v1376, 0.0
        %1397 = vadd.xlane.f32.xlu0 %v1396
        %v1398 = vpop.xlane.xlu0 %1397
        %v1399 = vsel %vm751, %v1377, 0.0
        %1400 = vadd.xlane.f32.xlu0 %v1399
        %v1401 = vpop.xlane.xlu0 %1400
        %v1402 = vsel %vm751, %v1378, 0.0
        %1403 = vadd.xlane.f32.xlu0 %v1402
        %v1404 = vpop.xlane.xlu0 %1403
        %v1405 = vsel %vm751, %v1379, 0.0
        %1406 = vadd.xlane.f32.xlu0 %v1405
        %v1407 = vpop.xlane.xlu0 %1406
        %v1408 = vsel %vm751, %v1380, 0.0
        %1409 = vadd.xlane.f32.xlu0 %v1408
        %v1410 = vpop.xlane.xlu0 %1409
        %v1411 = vsel %vm751, %v1381, 0.0
        %1412 = vadd.xlane.f32.xlu0 %v1411
        %v1413 = vpop.xlane.xlu0 %1412
        %v1414 = vsel %vm751, %v1382, 0.0
        %1415 = vadd.xlane.f32.xlu0 %v1414
        %v1416 = vpop.xlane.xlu0 %1415
        %v1417 = vsel %vm751, %v1383, 0.0
        %1418 = vadd.xlane.f32.xlu0 %v1417
        %v1419 = vpop.xlane.xlu0 %1418
        %v1420 = vsel %vm751, %v1384, 0.0
        %1421 = vadd.xlane.f32.xlu0 %v1420
        %v1422 = vpop.xlane.xlu0 %1421
        %v1423 = vsel %vm751, %v1385, 0.0
        %1424 = vadd.xlane.f32.xlu0 %v1423
        %v1425 = vpop.xlane.xlu0 %1424
        %v1426 = vsel %vm751, %v1386, 0.0
        %1427 = vadd.xlane.f32.xlu0 %v1426
        %v1428 = vpop.xlane.xlu0 %1427
        %v1429 = vsel %vm751, %v1387, 0.0
        %1430 = vadd.xlane.f32.xlu0 %v1429
        %v1431 = vpop.xlane.xlu0 %1430
        %v1432 = vsel %vm751, %v1388, 0.0
        %1433 = vadd.xlane.f32.xlu0 %v1432
        %v1434 = vpop.xlane.xlu0 %1433
        %v1435 = vsel %vm751, %v1389, 0.0
        %1436 = vadd.xlane.f32.xlu0 %v1435
        %v1437 = vpop.xlane.xlu0 %1436
        %v1438 = vmul.f32 %v1392, %v1341
        %v1439 = vmul.f32 %v1395, %v1341
        %v1440 = vmul.f32 %v1398, %v1341
        %v1441 = vmul.f32 %v1401, %v1341
        %v1442 = vmul.f32 %v1404, %v1341
        %v1443 = vmul.f32 %v1407, %v1341
        %v1444 = vmul.f32 %v1410, %v1341
        %v1445 = vmul.f32 %v1413, %v1341
        %v1446 = vmul.f32 %v1416, %v1341
        %v1447 = vmul.f32 %v1419, %v1341
        %v1448 = vmul.f32 %v1422, %v1341
        %v1449 = vmul.f32 %v1425, %v1341
        %v1450 = vmul.f32 %v1428, %v1341
        %v1451 = vmul.f32 %v1431, %v1341
        %v1452 = vmul.f32 %v1434, %v1341
        %v1453 = vmul.f32 %v1437, %v1341
        %v1454 = vrsqrt.pop %v1438
        %v1455 = vmul.f32 %v1454, %v1438
        %v1456 = vmul.f32 %v1455, %v1454
        %v1457 = vmul.f32 0.5, %v1456
        %v1458 = vsub.f32 1.5, %v1457
        %v1459 = vmul.f32 %v1454, %v1458
        %v1460 = vmul.f32 %v1438, %v1459
        %vm1461 = vcmp.eq.f32.partialorder %v1438, inf
        %v1462 = vsel %vm1461, %v1438, %v1460
        %vm1463 = vcmp.eq.f32.partialorder %v1438, 0.0
        %v1464 = vand.u32 %v1438, 2147483648
        %v1465 = vsel %vm1463, %v1464, %v1462
        %v1466 = vrsqrt.pop %v1439
        %v1467 = vmul.f32 %v1466, %v1439
        %v1468 = vmul.f32 %v1467, %v1466
        %v1469 = vmul.f32 0.5, %v1468
        %v1470 = vsub.f32 1.5, %v1469
        %v1471 = vmul.f32 %v1466, %v1470
        %v1472 = vmul.f32 %v1439, %v1471
        %vm1473 = vcmp.eq.f32.partialorder %v1439, inf
        %v1474 = vsel %vm1473, %v1439, %v1472
        %vm1475 = vcmp.eq.f32.partialorder %v1439, 0.0
        %v1476 = vand.u32 %v1439, 2147483648
        %v1477 = vsel %vm1475, %v1476, %v1474
        %v1478 = vrsqrt.pop %v1440
        %v1479 = vmul.f32 %v1478, %v1440
        %v1480 = vmul.f32 %v1479, %v1478
        %v1481 = vmul.f32 0.5, %v1480
        %v1482 = vsub.f32 1.5, %v1481
        %v1483 = vmul.f32 %v1478, %v1482
        %v1484 = vmul.f32 %v1440, %v1483
        %vm1485 = vcmp.eq.f32.partialorder %v1440, inf
        %v1486 = vsel %vm1485, %v1440, %v1484
        %vm1487 = vcmp.eq.f32.partialorder %v1440, 0.0
        %v1488 = vand.u32 %v1440, 2147483648
        %v1489 = vsel %vm1487, %v1488, %v1486
        %v1490 = vrsqrt.pop %v1441
        %v1491 = vmul.f32 %v1490, %v1441
        %v1492 = vmul.f32 %v1491, %v1490
        %v1493 = vmul.f32 0.5, %v1492
        %v1494 = vsub.f32 1.5, %v1493
        %v1495 = vmul.f32 %v1490, %v1494
        %v1496 = vmul.f32 %v1441, %v1495
        %vm1497 = vcmp.eq.f32.partialorder %v1441, inf
        %v1498 = vsel %vm1497, %v1441, %v1496
        %vm1499 = vcmp.eq.f32.partialorder %v1441, 0.0
        %v1500 = vand.u32 %v1441, 2147483648
        %v1501 = vsel %vm1499, %v1500, %v1498
        %v1502 = vrsqrt.pop %v1442
        %v1503 = vmul.f32 %v1502, %v1442
        %v1504 = vmul.f32 %v1503, %v1502
        %v1505 = vmul.f32 0.5, %v1504
        %v1506 = vsub.f32 1.5, %v1505
        %v1507 = vmul.f32 %v1502, %v1506
        %v1508 = vmul.f32 %v1442, %v1507
        %vm1509 = vcmp.eq.f32.partialorder %v1442, inf
        %v1510 = vsel %vm1509, %v1442, %v1508
        %vm1511 = vcmp.eq.f32.partialorder %v1442, 0.0
        %v1512 = vand.u32 %v1442, 2147483648
        %v1513 = vsel %vm1511, %v1512, %v1510
        %v1514 = vrsqrt.pop %v1443
        %v1515 = vmul.f32 %v1514, %v1443
        %v1516 = vmul.f32 %v1515, %v1514
        %v1517 = vmul.f32 0.5, %v1516
        %v1518 = vsub.f32 1.5, %v1517
        %v1519 = vmul.f32 %v1514, %v1518
        %v1520 = vmul.f32 %v1443, %v1519
        %vm1521 = vcmp.eq.f32.partialorder %v1443, inf
        %v1522 = vsel %vm1521, %v1443, %v1520
        %vm1523 = vcmp.eq.f32.partialorder %v1443, 0.0
        %v1524 = vand.u32 %v1443, 2147483648
        %v1525 = vsel %vm1523, %v1524, %v1522
        %v1526 = vrsqrt.pop %v1444
        %v1527 = vmul.f32 %v1526, %v1444
        %v1528 = vmul.f32 %v1527, %v1526
        %v1529 = vmul.f32 0.5, %v1528
        %v1530 = vsub.f32 1.5, %v1529
        %v1531 = vmul.f32 %v1526, %v1530
        %v1532 = vmul.f32 %v1444, %v1531
        %vm1533 = vcmp.eq.f32.partialorder %v1444, inf
        %v1534 = vsel %vm1533, %v1444, %v1532
        %vm1535 = vcmp.eq.f32.partialorder %v1444, 0.0
        %v1536 = vand.u32 %v1444, 2147483648
        %v1537 = vsel %vm1535, %v1536, %v1534
        %v1538 = vrsqrt.pop %v1445
        %v1539 = vmul.f32 %v1538, %v1445
        %v1540 = vmul.f32 %v1539, %v1538
        %v1541 = vmul.f32 0.5, %v1540
        %v1542 = vsub.f32 1.5, %v1541
        %v1543 = vmul.f32 %v1538, %v1542
        %v1544 = vmul.f32 %v1445, %v1543
        %vm1545 = vcmp.eq.f32.partialorder %v1445, inf
        %v1546 = vsel %vm1545, %v1445, %v1544
        %vm1547 = vcmp.eq.f32.partialorder %v1445, 0.0
        %v1548 = vand.u32 %v1445, 2147483648
        %v1549 = vsel %vm1547, %v1548, %v1546
        %v1550 = vrsqrt.pop %v1446
        %v1551 = vmul.f32 %v1550, %v1446
        %v1552 = vmul.f32 %v1551, %v1550
        %v1553 = vmul.f32 0.5, %v1552
        %v1554 = vsub.f32 1.5, %v1553
        %v1555 = vmul.f32 %v1550, %v1554
        %v1556 = vmul.f32 %v1446, %v1555
        %vm1557 = vcmp.eq.f32.partialorder %v1446, inf
        %v1558 = vsel %vm1557, %v1446, %v1556
        %vm1559 = vcmp.eq.f32.partialorder %v1446, 0.0
        %v1560 = vand.u32 %v1446, 2147483648
        %v1561 = vsel %vm1559, %v1560, %v1558
        %v1562 = vrsqrt.pop %v1447
        %v1563 = vmul.f32 %v1562, %v1447
        %v1564 = vmul.f32 %v1563, %v1562
        %v1565 = vmul.f32 0.5, %v1564
        %v1566 = vsub.f32 1.5, %v1565
        %v1567 = vmul.f32 %v1562, %v1566
        %v1568 = vmul.f32 %v1447, %v1567
        %vm1569 = vcmp.eq.f32.partialorder %v1447, inf
        %v1570 = vsel %vm1569, %v1447, %v1568
        %vm1571 = vcmp.eq.f32.partialorder %v1447, 0.0
        %v1572 = vand.u32 %v1447, 2147483648
        %v1573 = vsel %vm1571, %v1572, %v1570
        %v1574 = vrsqrt.pop %v1448
        %v1575 = vmul.f32 %v1574, %v1448
        %v1576 = vmul.f32 %v1575, %v1574
        %v1577 = vmul.f32 0.5, %v1576
        %v1578 = vsub.f32 1.5, %v1577
        %v1579 = vmul.f32 %v1574, %v1578
        %v1580 = vmul.f32 %v1448, %v1579
        %vm1581 = vcmp.eq.f32.partialorder %v1448, inf
        %v1582 = vsel %vm1581, %v1448, %v1580
        %vm1583 = vcmp.eq.f32.partialorder %v1448, 0.0
        %v1584 = vand.u32 %v1448, 2147483648
        %v1585 = vsel %vm1583, %v1584, %v1582
        %v1586 = vrsqrt.pop %v1449
        %v1587 = vmul.f32 %v1586, %v1449
        %v1588 = vmul.f32 %v1587, %v1586
        %v1589 = vmul.f32 0.5, %v1588
        %v1590 = vsub.f32 1.5, %v1589
        %v1591 = vmul.f32 %v1586, %v1590
        %v1592 = vmul.f32 %v1449, %v1591
        %vm1593 = vcmp.eq.f32.partialorder %v1449, inf
        %v1594 = vsel %vm1593, %v1449, %v1592
        %vm1595 = vcmp.eq.f32.partialorder %v1449, 0.0
        %v1596 = vand.u32 %v1449, 2147483648
        %v1597 = vsel %vm1595, %v1596, %v1594
        %v1598 = vrsqrt.pop %v1450
        %v1599 = vmul.f32 %v1598, %v1450
        %v1600 = vmul.f32 %v1599, %v1598
        %v1601 = vmul.f32 0.5, %v1600
        %v1602 = vsub.f32 1.5, %v1601
        %v1603 = vmul.f32 %v1598, %v1602
        %v1604 = vmul.f32 %v1450, %v1603
        %vm1605 = vcmp.eq.f32.partialorder %v1450, inf
        %v1606 = vsel %vm1605, %v1450, %v1604
        %vm1607 = vcmp.eq.f32.partialorder %v1450, 0.0
        %v1608 = vand.u32 %v1450, 2147483648
        %v1609 = vsel %vm1607, %v1608, %v1606
        %v1610 = vrsqrt.pop %v1451
        %v1611 = vmul.f32 %v1610, %v1451
        %v1612 = vmul.f32 %v1611, %v1610
        %v1613 = vmul.f32 0.5, %v1612
        %v1614 = vsub.f32 1.5, %v1613
        %v1615 = vmul.f32 %v1610, %v1614
        %v1616 = vmul.f32 %v1451, %v1615
        %vm1617 = vcmp.eq.f32.partialorder %v1451, inf
        %v1618 = vsel %vm1617, %v1451, %v1616
        %vm1619 = vcmp.eq.f32.partialorder %v1451, 0.0
        %v1620 = vand.u32 %v1451, 2147483648
        %v1621 = vsel %vm1619, %v1620, %v1618
        %v1622 = vrsqrt.pop %v1452
        %v1623 = vmul.f32 %v1622, %v1452
        %v1624 = vmul.f32 %v1623, %v1622
        %v1625 = vmul.f32 0.5, %v1624
        %v1626 = vsub.f32 1.5, %v1625
        %v1627 = vmul.f32 %v1622, %v1626
        %v1628 = vmul.f32 %v1452, %v1627
        %vm1629 = vcmp.eq.f32.partialorder %v1452, inf
        %v1630 = vsel %vm1629, %v1452, %v1628
        %vm1631 = vcmp.eq.f32.partialorder %v1452, 0.0
        %v1632 = vand.u32 %v1452, 2147483648
        %v1633 = vsel %vm1631, %v1632, %v1630
        %v1634 = vrsqrt.pop %v1453
        %v1635 = vmul.f32 %v1634, %v1453
        %v1636 = vmul.f32 %v1635, %v1634
        %v1637 = vmul.f32 0.5, %v1636
        %v1638 = vsub.f32 1.5, %v1637
        %v1639 = vmul.f32 %v1634, %v1638
        %v1640 = vmul.f32 %v1453, %v1639
        %vm1641 = vcmp.eq.f32.partialorder %v1453, inf
        %v1642 = vsel %vm1641, %v1453, %v1640
        %vm1643 = vcmp.eq.f32.partialorder %v1453, 0.0
        %v1644 = vand.u32 %v1453, 2147483648
        %v1645 = vsel %vm1643, %v1644, %v1642
        %v1646 = vadd.f32 %v1465, 1e-06
        %v1647 = vadd.f32 %v1477, 1e-06
        %v1648 = vadd.f32 %v1489, 1e-06
        %v1649 = vadd.f32 %v1501, 1e-06
        %v1650 = vadd.f32 %v1513, 1e-06
        %v1651 = vadd.f32 %v1525, 1e-06
        %v1652 = vadd.f32 %v1537, 1e-06
        %v1653 = vadd.f32 %v1549, 1e-06
        %v1654 = vadd.f32 %v1561, 1e-06
        %v1655 = vadd.f32 %v1573, 1e-06
        %v1656 = vadd.f32 %v1585, 1e-06
        %v1657 = vadd.f32 %v1597, 1e-06
        %v1658 = vadd.f32 %v1609, 1e-06
        %v1659 = vadd.f32 %v1621, 1e-06
        %v1660 = vadd.f32 %v1633, 1e-06
        %v1661 = vadd.f32 %v1645, 1e-06
        %v1662 = vrcp.pop %v1646
        %v1663 = vmul.f32 %v1646, %v1662
        %v1664 = vsub.f32 1.0, %v1663
        %v1665 = vmul.f32 %v1662, %v1664
        %v1666 = vadd.f32 %v1662, %v1665
        %vm1667 = vweird.f32 %v1646
        %vm1668 = vweird.f32 %v1662
        %vm1669 = vmor %vm1667, %vm1668
        %v1670 = vsel %vm1669, %v1662, %v1666
        %v1671 = vand.u32 2147483647, %v1646
        %vm1672 = vcmp.eq.f32.partialorder %v1671, 8.507059e+37
        %v1673 = vand.u32 %v1646, 2147483648
        %v1674 = vor.u32 1.1754944e-38, %v1673
        %v1675 = vsel %vm1672, %v1674, %v1670
        %v1676 = vmul.f32 %v1358, %v1675
        %v1677 = vrcp.pop %v1647
        %v1678 = vmul.f32 %v1647, %v1677
        %v1679 = vsub.f32 1.0, %v1678
        %v1680 = vmul.f32 %v1677, %v1679
        %v1681 = vadd.f32 %v1677, %v1680
        %vm1682 = vweird.f32 %v1647
        %vm1683 = vweird.f32 %v1677
        %vm1684 = vmor %vm1682, %vm1683
        %v1685 = vsel %vm1684, %v1677, %v1681
        %v1686 = vand.u32 2147483647, %v1647
        %vm1687 = vcmp.eq.f32.partialorder %v1686, 8.507059e+37
        %v1688 = vand.u32 %v1647, 2147483648
        %v1689 = vor.u32 1.1754944e-38, %v1688
        %v1690 = vsel %vm1687, %v1689, %v1685
        %v1691 = vmul.f32 %v1359, %v1690
        %v1692 = vrcp.pop %v1648
        %v1693 = vmul.f32 %v1648, %v1692
        %v1694 = vsub.f32 1.0, %v1693
        %v1695 = vmul.f32 %v1692, %v1694
        %v1696 = vadd.f32 %v1692, %v1695
        %vm1697 = vweird.f32 %v1648
        %vm1698 = vweird.f32 %v1692
        %vm1699 = vmor %vm1697, %vm1698
        %v1700 = vsel %vm1699, %v1692, %v1696
        %v1701 = vand.u32 2147483647, %v1648
        %vm1702 = vcmp.eq.f32.partialorder %v1701, 8.507059e+37
        %v1703 = vand.u32 %v1648, 2147483648
        %v1704 = vor.u32 1.1754944e-38, %v1703
        %v1705 = vsel %vm1702, %v1704, %v1700
        %v1706 = vmul.f32 %v1360, %v1705
        %v1707 = vrcp.pop %v1649
        %v1708 = vmul.f32 %v1649, %v1707
        %v1709 = vsub.f32 1.0, %v1708
        %v1710 = vmul.f32 %v1707, %v1709
        %v1711 = vadd.f32 %v1707, %v1710
        %vm1712 = vweird.f32 %v1649
        %vm1713 = vweird.f32 %v1707
        %vm1714 = vmor %vm1712, %vm1713
        %v1715 = vsel %vm1714, %v1707, %v1711
        %v1716 = vand.u32 2147483647, %v1649
        %vm1717 = vcmp.eq.f32.partialorder %v1716, 8.507059e+37
        %v1718 = vand.u32 %v1649, 2147483648
        %v1719 = vor.u32 1.1754944e-38, %v1718
        %v1720 = vsel %vm1717, %v1719, %v1715
        %v1721 = vmul.f32 %v1361, %v1720
        %v1722 = vrcp.pop %v1650
        %v1723 = vmul.f32 %v1650, %v1722
        %v1724 = vsub.f32 1.0, %v1723
        %v1725 = vmul.f32 %v1722, %v1724
        %v1726 = vadd.f32 %v1722, %v1725
        %vm1727 = vweird.f32 %v1650
        %vm1728 = vweird.f32 %v1722
        %vm1729 = vmor %vm1727, %vm1728
        %v1730 = vsel %vm1729, %v1722, %v1726
        %v1731 = vand.u32 2147483647, %v1650
        %vm1732 = vcmp.eq.f32.partialorder %v1731, 8.507059e+37
        %v1733 = vand.u32 %v1650, 2147483648
        %v1734 = vor.u32 1.1754944e-38, %v1733
        %v1735 = vsel %vm1732, %v1734, %v1730
        %v1736 = vmul.f32 %v1362, %v1735
        %v1737 = vrcp.pop %v1651
        %v1738 = vmul.f32 %v1651, %v1737
        %v1739 = vsub.f32 1.0, %v1738
        %v1740 = vmul.f32 %v1737, %v1739
        %v1741 = vadd.f32 %v1737, %v1740
        %vm1742 = vweird.f32 %v1651
        %vm1743 = vweird.f32 %v1737
        %vm1744 = vmor %vm1742, %vm1743
        %v1745 = vsel %vm1744, %v1737, %v1741
        %v1746 = vand.u32 2147483647, %v1651
        %vm1747 = vcmp.eq.f32.partialorder %v1746, 8.507059e+37
        %v1748 = vand.u32 %v1651, 2147483648
        %v1749 = vor.u32 1.1754944e-38, %v1748
        %v1750 = vsel %vm1747, %v1749, %v1745
        %v1751 = vmul.f32 %v1363, %v1750
        %v1752 = vrcp.pop %v1652
        %v1753 = vmul.f32 %v1652, %v1752
        %v1754 = vsub.f32 1.0, %v1753
        %v1755 = vmul.f32 %v1752, %v1754
        %v1756 = vadd.f32 %v1752, %v1755
        %vm1757 = vweird.f32 %v1652
        %vm1758 = vweird.f32 %v1752
        %vm1759 = vmor %vm1757, %vm1758
        %v1760 = vsel %vm1759, %v1752, %v1756
        %v1761 = vand.u32 2147483647, %v1652
        %vm1762 = vcmp.eq.f32.partialorder %v1761, 8.507059e+37
        %v1763 = vand.u32 %v1652, 2147483648
        %v1764 = vor.u32 1.1754944e-38, %v1763
        %v1765 = vsel %vm1762, %v1764, %v1760
        %v1766 = vmul.f32 %v1364, %v1765
        %v1767 = vrcp.pop %v1653
        %v1768 = vmul.f32 %v1653, %v1767
        %v1769 = vsub.f32 1.0, %v1768
        %v1770 = vmul.f32 %v1767, %v1769
        %v1771 = vadd.f32 %v1767, %v1770
        %vm1772 = vweird.f32 %v1653
        %vm1773 = vweird.f32 %v1767
        %vm1774 = vmor %vm1772, %vm1773
        %v1775 = vsel %vm1774, %v1767, %v1771
        %v1776 = vand.u32 2147483647, %v1653
        %vm1777 = vcmp.eq.f32.partialorder %v1776, 8.507059e+37
        %v1778 = vand.u32 %v1653, 2147483648
        %v1779 = vor.u32 1.1754944e-38, %v1778
        %v1780 = vsel %vm1777, %v1779, %v1775
        %v1781 = vmul.f32 %v1365, %v1780
        %v1782 = vrcp.pop %v1654
        %v1783 = vmul.f32 %v1654, %v1782
        %v1784 = vsub.f32 1.0, %v1783
        %v1785 = vmul.f32 %v1782, %v1784
        %v1786 = vadd.f32 %v1782, %v1785
        %vm1787 = vweird.f32 %v1654
        %vm1788 = vweird.f32 %v1782
        %vm1789 = vmor %vm1787, %vm1788
        %v1790 = vsel %vm1789, %v1782, %v1786
        %v1791 = vand.u32 2147483647, %v1654
        %vm1792 = vcmp.eq.f32.partialorder %v1791, 8.507059e+37
        %v1793 = vand.u32 %v1654, 2147483648
        %v1794 = vor.u32 1.1754944e-38, %v1793
        %v1795 = vsel %vm1792, %v1794, %v1790
        %v1796 = vmul.f32 %v1366, %v1795
        %v1797 = vrcp.pop %v1655
        %v1798 = vmul.f32 %v1655, %v1797
        %v1799 = vsub.f32 1.0, %v1798
        %v1800 = vmul.f32 %v1797, %v1799
        %v1801 = vadd.f32 %v1797, %v1800
        %vm1802 = vweird.f32 %v1655
        %vm1803 = vweird.f32 %v1797
        %vm1804 = vmor %vm1802, %vm1803
        %v1805 = vsel %vm1804, %v1797, %v1801
        %v1806 = vand.u32 2147483647, %v1655
        %vm1807 = vcmp.eq.f32.partialorder %v1806, 8.507059e+37
        %v1808 = vand.u32 %v1655, 2147483648
        %v1809 = vor.u32 1.1754944e-38, %v1808
        %v1810 = vsel %vm1807, %v1809, %v1805
        %v1811 = vmul.f32 %v1367, %v1810
        %v1812 = vrcp.pop %v1656
        %v1813 = vmul.f32 %v1656, %v1812
        %v1814 = vsub.f32 1.0, %v1813
        %v1815 = vmul.f32 %v1812, %v1814
        %v1816 = vadd.f32 %v1812, %v1815
        %vm1817 = vweird.f32 %v1656
        %vm1818 = vweird.f32 %v1812
        %vm1819 = vmor %vm1817, %vm1818
        %v1820 = vsel %vm1819, %v1812, %v1816
        %v1821 = vand.u32 2147483647, %v1656
        %vm1822 = vcmp.eq.f32.partialorder %v1821, 8.507059e+37
        %v1823 = vand.u32 %v1656, 2147483648
        %v1824 = vor.u32 1.1754944e-38, %v1823
        %v1825 = vsel %vm1822, %v1824, %v1820
        %v1826 = vmul.f32 %v1368, %v1825
        %v1827 = vrcp.pop %v1657
        %v1828 = vmul.f32 %v1657, %v1827
        %v1829 = vsub.f32 1.0, %v1828
        %v1830 = vmul.f32 %v1827, %v1829
        %v1831 = vadd.f32 %v1827, %v1830
        %vm1832 = vweird.f32 %v1657
        %vm1833 = vweird.f32 %v1827
        %vm1834 = vmor %vm1832, %vm1833
        %v1835 = vsel %vm1834, %v1827, %v1831
        %v1836 = vand.u32 2147483647, %v1657
        %vm1837 = vcmp.eq.f32.partialorder %v1836, 8.507059e+37
        %v1838 = vand.u32 %v1657, 2147483648
        %v1839 = vor.u32 1.1754944e-38, %v1838
        %v1840 = vsel %vm1837, %v1839, %v1835
        %v1841 = vmul.f32 %v1369, %v1840
        %v1842 = vrcp.pop %v1658
        %v1843 = vmul.f32 %v1658, %v1842
        %v1844 = vsub.f32 1.0, %v1843
        %v1845 = vmul.f32 %v1842, %v1844
        %v1846 = vadd.f32 %v1842, %v1845
        %vm1847 = vweird.f32 %v1658
        %vm1848 = vweird.f32 %v1842
        %vm1849 = vmor %vm1847, %vm1848
        %v1850 = vsel %vm1849, %v1842, %v1846
        %v1851 = vand.u32 2147483647, %v1658
        %vm1852 = vcmp.eq.f32.partialorder %v1851, 8.507059e+37
        %v1853 = vand.u32 %v1658, 2147483648
        %v1854 = vor.u32 1.1754944e-38, %v1853
        %v1855 = vsel %vm1852, %v1854, %v1850
        %v1856 = vmul.f32 %v1370, %v1855
        %v1857 = vrcp.pop %v1659
        %v1858 = vmul.f32 %v1659, %v1857
        %v1859 = vsub.f32 1.0, %v1858
        %v1860 = vmul.f32 %v1857, %v1859
        %v1861 = vadd.f32 %v1857, %v1860
        %vm1862 = vweird.f32 %v1659
        %vm1863 = vweird.f32 %v1857
        %vm1864 = vmor %vm1862, %vm1863
        %v1865 = vsel %vm1864, %v1857, %v1861
        %v1866 = vand.u32 2147483647, %v1659
        %vm1867 = vcmp.eq.f32.partialorder %v1866, 8.507059e+37
        %v1868 = vand.u32 %v1659, 2147483648
        %v1869 = vor.u32 1.1754944e-38, %v1868
        %v1870 = vsel %vm1867, %v1869, %v1865
        %v1871 = vmul.f32 %v1371, %v1870
        %v1872 = vrcp.pop %v1660
        %v1873 = vmul.f32 %v1660, %v1872
        %v1874 = vsub.f32 1.0, %v1873
        %v1875 = vmul.f32 %v1872, %v1874
        %v1876 = vadd.f32 %v1872, %v1875
        %vm1877 = vweird.f32 %v1660
        %vm1878 = vweird.f32 %v1872
        %vm1879 = vmor %vm1877, %vm1878
        %v1880 = vsel %vm1879, %v1872, %v1876
        %v1881 = vand.u32 2147483647, %v1660
        %vm1882 = vcmp.eq.f32.partialorder %v1881, 8.507059e+37
        %v1883 = vand.u32 %v1660, 2147483648
        %v1884 = vor.u32 1.1754944e-38, %v1883
        %v1885 = vsel %vm1882, %v1884, %v1880
        %v1886 = vmul.f32 %v1372, %v1885
        %v1887 = vrcp.pop %v1661
        %v1888 = vmul.f32 %v1661, %v1887
        %v1889 = vsub.f32 1.0, %v1888
        %v1890 = vmul.f32 %v1887, %v1889
        %v1891 = vadd.f32 %v1887, %v1890
        %vm1892 = vweird.f32 %v1661
        %vm1893 = vweird.f32 %v1887
        %vm1894 = vmor %vm1892, %vm1893
        %v1895 = vsel %vm1894, %v1887, %v1891
        %v1896 = vand.u32 2147483647, %v1661
        %vm1897 = vcmp.eq.f32.partialorder %v1896, 8.507059e+37
        %v1898 = vand.u32 %v1661, 2147483648
        %v1899 = vor.u32 1.1754944e-38, %v1898
        %v1900 = vsel %vm1897, %v1899, %v1895
        %v1901 = vmul.f32 %v1373, %v1900
        %v1903 = vperm.slane %v335, 0
        %v1905 = vmul.f32 %v1676, %v1903
        %v1906 = vmul.f32 %v1691, %v1903
        %v1907 = vmul.f32 %v1706, %v1903
        %v1908 = vmul.f32 %v1721, %v1903
        %v1909 = vmul.f32 %v1736, %v1903
        %v1910 = vmul.f32 %v1751, %v1903
        %v1911 = vmul.f32 %v1766, %v1903
        %v1912 = vmul.f32 %v1781, %v1903
        %v1913 = vmul.f32 %v1796, %v1903
        %v1914 = vmul.f32 %v1811, %v1903
        %v1915 = vmul.f32 %v1826, %v1903
        %v1916 = vmul.f32 %v1841, %v1903
        %v1917 = vmul.f32 %v1856, %v1903
        %v1918 = vmul.f32 %v1871, %v1903
        %v1919 = vmul.f32 %v1886, %v1903
        %v1920 = vmul.f32 %v1901, %v1903
        %v1922 = vperm.slane %v336, 0
        %v1924 = vadd.f32 %v1905, %v1922
        %v1925 = vadd.f32 %v1906, %v1922
        %v1926 = vadd.f32 %v1907, %v1922
        %v1927 = vadd.f32 %v1908, %v1922
        %v1928 = vadd.f32 %v1909, %v1922
        %v1929 = vadd.f32 %v1910, %v1922
        %v1930 = vadd.f32 %v1911, %v1922
        %v1931 = vadd.f32 %v1912, %v1922
        %v1932 = vadd.f32 %v1913, %v1922
        %v1933 = vadd.f32 %v1914, %v1922
        %v1934 = vadd.f32 %v1915, %v1922
        %v1935 = vadd.f32 %v1916, %v1922
        %v1936 = vadd.f32 %v1917, %v1922
        %v1937 = vadd.f32 %v1918, %v1922
        %v1938 = vadd.f32 %v1919, %v1922
        %v1939 = vadd.f32 %v1920, %v1922
        %1940 = vst.msk [vmem:[%s268] sm:$0xff] %vm751, %v1924
        %1941 = vst.msk [vmem:[%s268 + $0x8] sm:$0xff] %vm751, %v1925
        %1942 = vst.msk [vmem:[%s268 + $0x10] sm:$0xff] %vm751, %v1926
        %1943 = vst.msk [vmem:[%s268 + $0x18] sm:$0xff] %vm751, %v1927
        %1944 = vst.msk [vmem:[%s268 + $0x20] sm:$0xff] %vm751, %v1928
        %1945 = vst.msk [vmem:[%s268 + $0x28] sm:$0xff] %vm751, %v1929
        %1946 = vst.msk [vmem:[%s268 + $0x30] sm:$0xff] %vm751, %v1930
        %1947 = vst.msk [vmem:[%s268 + $0x38] sm:$0xff] %vm751, %v1931
        %1948 = vst.msk [vmem:[%s268 + $0x40] sm:$0xff] %vm751, %v1932
        %1949 = vst.msk [vmem:[%s268 + $0x48] sm:$0xff] %vm751, %v1933
        %1950 = vst.msk [vmem:[%s268 + $0x50] sm:$0xff] %vm751, %v1934
        %1951 = vst.msk [vmem:[%s268 + $0x58] sm:$0xff] %vm751, %v1935
        %1952 = vst.msk [vmem:[%s268 + $0x60] sm:$0xff] %vm751, %v1936
        %1953 = vst.msk [vmem:[%s268 + $0x68] sm:$0xff] %vm751, %v1937
        %1954 = vst.msk [vmem:[%s268 + $0x70] sm:$0xff] %vm751, %v1938
        %1955 = vst.msk [vmem:[%s268 + $0x78] sm:$0xff] %vm751, %v1939
        %p1956 = scmp.lt.s32.totalorder %s18, 1
        %s1957 = scalar_select %p1956, %s18, 1
        %s1958 = smul.addr %s1957, 16
        %s1959 = smul.addr %s1958, 8
        %s1960 = scalar_lea.vmem %s6, %s1959
        // Predicated region
        $region49: #{tpu_custom_call.1} parent=43 // pred_check
          %p1961 = pneg %p167
        $region50: #{tpu_custom_call.1} parent=43 // pred_check_branch
          %1963 = sbr.rel (%p1961) target = $region52
        $region51: #{tpu_custom_call.1} parent=43 // pred_region
          _
        $region52: #{tpu_custom_call.1} parent=43 // pred_fallthru
          _
      $region44: #{tpu_custom_call.1} parent=5 // pred_fallthru
        _
      %p1964 = scmp.le.s32.totalorder 2, %s13
      // Predicated region
      $region53: #{tpu_custom_call.1} parent=5 // pred_check
        %p1965 = pneg %p1964
      $region54: #{tpu_custom_call.1} parent=5 // pred_check_branch
        %1967 = sbr.rel (%p1965) target = $region56
      $region55: #{tpu_custom_call.1} parent=5 // pred_region
        %s1968 = ssub.s32 %s13, 2
        // Predicated region
        $region57: #{tpu_custom_call.1} parent=55 // pred_check
          %p1969 = pneg %p173
        $region58: #{tpu_custom_call.1} parent=55 // pred_check_branch
          %1971 = sbr.rel (%p1969) target = $region60
        $region59: #{tpu_custom_call.1} parent=55 // pred_region
          %p1972 = scmp.lt.s32.totalorder %s19, 1
          %s1973 = scalar_select %p1972, %s19, 1
          %s1974 = smul.addr %s1973, 16
          %s1975 = smul.addr %s1974, 8
          %s1976 = scalar_lea.vmem %s6, %s1975
        $region60: #{tpu_custom_call.1} parent=55 // pred_fallthru
          _
      $region56: #{tpu_custom_call.1} parent=5 // pred_fallthru
        _
    $region6: #{tpu_custom_call.1} parent=1 // loop_footer
      %s17 = sadd.s32 1, %s13
    $region7: #{tpu_custom_call.1} parent=1 // loop_footer_branch
      %12 = sbr.rel target = $region3
    $region8: #{tpu_custom_call.1} parent=1 // loop_exit
      _
    %1977 = vsyncpa [#allocation3], 1
    %s1978 = scalar_lea.sflag [#allocation3], 1
    %1979 = vsyncpa %s1978, 1

</llo_original>
